<compile_context>
chip_gen: v7x
topology: tpu7x:2x2x1
jax: 0.10.0
libtpu: 0.0.40
codegen_flags: <defaults>
</compile_context>

<pallas_src>
import functools
import math

import jax
import jax.numpy as jnp
from jax import lax
from jax.experimental import pallas as pl

# ---- model hyper-parameters (small, consistent with the module) ----
BATCH = 2
NUM_TOKENS = 8          # T
EMBED_DIM = 32          # E
NUM_HEADS = 4           # H
FFWD_EXPANSION = 4
FF_DIM = FFWD_EXPANSION * EMBED_DIM     # 128
HEAD_DIM = EMBED_DIM // NUM_HEADS       # 8
LN_EPS = 1e-5

# packed-slab layout constants
VEC_ROWS = 8
SLAB_LANES = 128
W_ROWS = 3 * EMBED_DIM + FF_DIM         # 96 + 128 = 224


def _layer_norm(x, gamma, beta):
    mu = jnp.mean(x, axis=-1, keepdims=True)
    var = jnp.mean((x - mu) ** 2, axis=-1, keepdims=True)
    return (x - mu) * lax.rsqrt(var + LN_EPS) * gamma + beta


def transformer_block_kernel(
    x_ref,                 # (B*T, E) f32
    vec_ref,               # (8, 128) f32 packed vectors
    w_ref,                 # (224, 128) f32 packed weights
    o_ref,                 # (B*T, E) f32
    *, batch: int, num_tokens: int, num_heads: int,
):
    x = x_ref[...]                                  # (B*T, E)
    BT, E = x.shape
    B, T, H = batch, num_tokens, num_heads
    hd = E // H
    FF = FFWD_EXPANSION * E
    scale = 1.0 / math.sqrt(hd)

    # ---- packed vector params (static slices of the lane-dense slab) ----
    ln1_g = vec_ref[0:1, 0:E]
    ln1_b = vec_ref[1:2, 0:E]
    ln2_g = vec_ref[2:3, 0:E]
    ln2_b = vec_ref[3:4, 0:E]
    bqkv  = vec_ref[4:5, 0:3 * E]
    bo    = vec_ref[5:6, 0:E]
    b1    = vec_ref[6:7, 0:FF]
    b2    = vec_ref[7:8, 0:E]

    # ---- packed weight matrices (static slices of one slab) ----
    wqkv = w_ref[0:E, 0:3 * E]                      # (E, 3E)
    wo   = w_ref[E:2 * E, 0:E]                      # (E, E)
    w1   = w_ref[2 * E:3 * E, 0:FF]                 # (E, FF)
    w2   = w_ref[3 * E:3 * E + FF, 0:E]             # (FF, E)

    # ---- LayerNorm 1 (all B*T rows at once) ----
    ln1 = _layer_norm(x, ln1_g, ln1_b)

    # ---- fused QKV projection: one (B*T,E)@(E,3E) matmul ----
    qkv = jnp.dot(ln1, wqkv, preferred_element_type=jnp.float32) + bqkv   # (B*T, 3E)
    qkv3 = qkv.reshape(B, T, 3 * E)                 # layout-preserving split of leading dim

    # ---- causal mask as an additive bias, computed once ----
    row = lax.broadcasted_iota(jnp.int32, (T, T), 0)
    col = lax.broadcasted_iota(jnp.int32, (T, T), 1)
    mask_bias = jnp.where(col <= row, 0.0, -1e30).astype(jnp.float32)     # (T, T)

    # ---- per-head attention, batched over the batch dim; outputs stay in vregs ----
    head_outs = []
    for h in range(H):
        qh = qkv3[:, :, h * hd:(h + 1) * hd]                    # (B, T, hd)
        kh = qkv3[:, :, E + h * hd:E + (h + 1) * hd]            # (B, T, hd)
        vh = qkv3[:, :, 2 * E + h * hd:2 * E + (h + 1) * hd]    # (B, T, hd)
        s = jnp.einsum("btd,bsd->bts", qh, kh,
                       preferred_element_type=jnp.float32) * scale       # (B, T, T)
        s = s + mask_bias
        m = jnp.max(s, axis=-1, keepdims=True)
        p = jnp.exp(s - m)
        denom = jnp.sum(p, axis=-1, keepdims=True)
        # EUP approximate reciprocal + one Newton step: off the VPU path, f32-accurate.
        r = pl.reciprocal(denom, approx=True)
        r = r * (2.0 - denom * r)
        oh = jnp.einsum("bts,bsd->btd", p, vh,
                        preferred_element_type=jnp.float32) * r          # (B, T, hd)
        head_outs.append(oh)

    # ---- concatenate heads in vregs (no VMEM scratch) + one out-projection matmul ----
    attn_heads = jnp.concatenate(head_outs, axis=-1).reshape(BT, E)       # (B*T, E)
    attn = jnp.dot(attn_heads, wo, preferred_element_type=jnp.float32) + bo
    mha_res = attn + x                              # residual 1

    # ---- LayerNorm 2 + MLP ----
    ln2 = _layer_norm(mha_res, ln2_g, ln2_b)
    h1 = jnp.maximum(
        jnp.dot(ln2, w1, preferred_element_type=jnp.float32) + b1, 0.0)
    ff = jnp.dot(h1, w2, preferred_element_type=jnp.float32) + b2

    o_ref[...] = ff + mha_res                       # residual 2 (+ dropout = identity)


def pack_params(params):
    """Pack all parameters into two lane-dense f32 slabs (3 total kernel inputs)."""
    E, FF = EMBED_DIM, FF_DIM
    vec = jnp.zeros((VEC_ROWS, SLAB_LANES), jnp.float32)
    vec = vec.at[0, :E].set(params["ln1_g"])
    vec = vec.at[1, :E].set(params["ln1_b"])
    vec = vec.at[2, :E].set(params["ln2_g"])
    vec = vec.at[3, :E].set(params["ln2_b"])
    vec = vec.at[4, :3 * E].set(params["bqkv"])
    vec = vec.at[5, :E].set(params["bo"])
    vec = vec.at[6, :FF].set(params["b1"])
    vec = vec.at[7, :E].set(params["b2"])

    w = jnp.zeros((W_ROWS, SLAB_LANES), jnp.float32)
    w = w.at[0:E, 0:3 * E].set(params["wqkv_t"])
    w = w.at[E:2 * E, 0:E].set(params["wo_t"])
    w = w.at[2 * E:3 * E, 0:FF].set(params["w1_t"])
    w = w.at[3 * E:3 * E + FF, 0:E].set(params["w2_t"])
    return vec, w


def transformer_block(x, params):
    B, T, E = x.shape
    x_flat = x.reshape(B * T, E)
    vec, w = pack_params(params)

    kernel = functools.partial(
        transformer_block_kernel, batch=B, num_tokens=T, num_heads=NUM_HEADS)

    out_flat = pl.pallas_call(
        kernel,
        out_shape=jax.ShapeDtypeStruct((B * T, E), jnp.float32),
    )(x_flat, vec, w)
    return out_flat.reshape(B, T, E)


def reference(x, params):
    """Pure-JAX reference matching the PyTorch forward (eval mode)."""
    def ln(t, g, b):
        mu = t.mean(-1, keepdims=True)
        var = ((t - mu) ** 2).mean(-1, keepdims=True)
        return (t - mu) / jnp.sqrt(var + LN_EPS) * g + b

    B, T, E = x.shape
    ln1 = ln(x, params["ln1_g"], params["ln1_b"])
    qkv = ln1 @ params["wqkv_t"] + params["bqkv"]
    q, k, v = jnp.split(qkv, 3, axis=-1)

    def split_heads(t):
        return t.reshape(B, T, NUM_HEADS, HEAD_DIM).transpose(0, 2, 1, 3)

    qh, kh, vh = split_heads(q), split_heads(k), split_heads(v)
    s = jnp.einsum("bhtd,bhsd->bhts", qh, kh) / math.sqrt(HEAD_DIM)
    mask = jnp.tril(jnp.ones((T, T), bool))
    s = jnp.where(mask, s, -1e30)
    p = jax.nn.softmax(s, axis=-1)
    o = jnp.einsum("bhts,bhsd->bhtd", p, vh).transpose(0, 2, 1, 3).reshape(B, T, E)
    attn = o @ params["wo_t"] + params["bo"]
    res = attn + x
    ln2 = ln(res, params["ln2_g"], params["ln2_b"])
    ff = jnp.maximum(ln2 @ params["w1_t"] + params["b1"], 0.0) @ params["w2_t"] + params["b2"]
    return ff + res


def init_params(key):
    ks = jax.random.split(key, 6)
    scale = 0.02
    return {
        "ln1_g": jnp.ones((EMBED_DIM,), jnp.float32),
        "ln1_b": jnp.zeros((EMBED_DIM,), jnp.float32),
        # PyTorch in_proj_weight is (3E, E); store its transpose (E, 3E)
        "wqkv_t": scale * jax.random.normal(ks[0], (EMBED_DIM, 3 * EMBED_DIM), jnp.float32),
        "bqkv": scale * jax.random.normal(ks[1], (3 * EMBED_DIM,), jnp.float32),
        # out_proj.weight is (E, E); store transpose
        "wo_t": scale * jax.random.normal(ks[2], (EMBED_DIM, EMBED_DIM), jnp.float32),
        "bo": jnp.zeros((EMBED_DIM,), jnp.float32),
        "ln2_g": jnp.ones((EMBED_DIM,), jnp.float32),
        "ln2_b": jnp.zeros((EMBED_DIM,), jnp.float32),
        # linear1: (FF, E) -> transpose (E, FF) ; linear2: (E, FF) -> transpose (FF, E)
        "w1_t": scale * jax.random.normal(ks[3], (EMBED_DIM, FF_DIM), jnp.float32),
        "b1": scale * jax.random.normal(ks[4], (FF_DIM,), jnp.float32),
        "w2_t": scale * jax.random.normal(ks[5], (FF_DIM, EMBED_DIM), jnp.float32),
        "b2": jnp.zeros((EMBED_DIM,), jnp.float32),
    }


if __name__ == "__main__":
    key = jax.random.PRNGKey(0)
    k_x, k_p = jax.random.split(key)
    x = jax.random.normal(k_x, (BATCH, NUM_TOKENS, EMBED_DIM), jnp.float32)
    params = init_params(k_p)

    out = transformer_block(x, params)
    out = jax.block_until_ready(out)

    ref = reference(x, params)
    assert out.shape == (BATCH, NUM_TOKENS, EMBED_DIM)
    max_err = float(jnp.max(jnp.abs(out - ref)))
    assert jnp.allclose(out, ref, atol=1e-4, rtol=1e-4), max_err
    print("KERNEL_OK")
</pallas_src>

<mosaic_0001>
module attributes {stable_mosaic.version = 11 : i64} {
  func.func @transformer_block_kernel(%arg0: memref<16x32xf32, #tpu.memory_space<vmem>>, %arg1: memref<8x128xf32, #tpu.memory_space<vmem>>, %arg2: memref<224x128xf32, #tpu.memory_space<vmem>>, %arg3: memref<16x32xf32, #tpu.memory_space<vmem>>) attributes {dimension_semantics = [], scalar_prefetch = 0 : i64, scratch_operands = 0 : i64, tpu.core_type = #tpu.core_type<tc>} {
    %c0 = arith.constant 0 : index
    %c0_0 = arith.constant 0 : index
    %0 = vector.load %arg0[%c0, %c0_0] : memref<16x32xf32, #tpu.memory_space<vmem>>, vector<16x32xf32>
    %c0_1 = arith.constant 0 : index
    %c0_2 = arith.constant 0 : index
    %1 = vector.load %arg1[%c0_1, %c0_2] : memref<8x128xf32, #tpu.memory_space<vmem>>, vector<1x32xf32>
    %c1 = arith.constant 1 : index
    %c0_3 = arith.constant 0 : index
    %2 = vector.load %arg1[%c1, %c0_3] : memref<8x128xf32, #tpu.memory_space<vmem>>, vector<1x32xf32>
    %c2 = arith.constant 2 : index
    %c0_4 = arith.constant 0 : index
    %3 = vector.load %arg1[%c2, %c0_4] : memref<8x128xf32, #tpu.memory_space<vmem>>, vector<1x32xf32>
    %c3 = arith.constant 3 : index
    %c0_5 = arith.constant 0 : index
    %4 = vector.load %arg1[%c3, %c0_5] : memref<8x128xf32, #tpu.memory_space<vmem>>, vector<1x32xf32>
    %c4 = arith.constant 4 : index
    %c0_6 = arith.constant 0 : index
    %5 = vector.load %arg1[%c4, %c0_6] : memref<8x128xf32, #tpu.memory_space<vmem>>, vector<1x96xf32>
    %c5 = arith.constant 5 : index
    %c0_7 = arith.constant 0 : index
    %6 = vector.load %arg1[%c5, %c0_7] : memref<8x128xf32, #tpu.memory_space<vmem>>, vector<1x32xf32>
    %c6 = arith.constant 6 : index
    %c0_8 = arith.constant 0 : index
    %7 = vector.load %arg1[%c6, %c0_8] : memref<8x128xf32, #tpu.memory_space<vmem>>, vector<1x128xf32>
    %c7 = arith.constant 7 : index
    %c0_9 = arith.constant 0 : index
    %8 = vector.load %arg1[%c7, %c0_9] : memref<8x128xf32, #tpu.memory_space<vmem>>, vector<1x32xf32>
    %c0_10 = arith.constant 0 : index
    %c0_11 = arith.constant 0 : index
    %9 = vector.load %arg2[%c0_10, %c0_11] : memref<224x128xf32, #tpu.memory_space<vmem>>, vector<32x96xf32>
    %c32 = arith.constant 32 : index
    %c0_12 = arith.constant 0 : index
    %10 = vector.load %arg2[%c32, %c0_12] : memref<224x128xf32, #tpu.memory_space<vmem>>, vector<32x32xf32>
    %c64 = arith.constant 64 : index
    %c0_13 = arith.constant 0 : index
    %11 = vector.load %arg2[%c64, %c0_13] : memref<224x128xf32, #tpu.memory_space<vmem>>, vector<32x128xf32>
    %c96 = arith.constant 96 : index
    %c0_14 = arith.constant 0 : index
    %12 = vector.load %arg2[%c96, %c0_14] : memref<224x128xf32, #tpu.memory_space<vmem>>, vector<128x32xf32>
    %cst = arith.constant dense<0.000000e+00> : vector<16xf32>
    %13 = vector.multi_reduction <add>, %0, %cst [1] : vector<16x32xf32> to vector<16xf32>
    %14 = vector.shape_cast %13 : vector<16xf32> to vector<16x1xf32>
    %cst_15 = arith.constant 3.200000e+01 : f32
    %15 = vector.broadcast %cst_15 : f32 to vector<16x1xf32>
    %16 = arith.divf %14, %15 : vector<16x1xf32>
    %17 = vector.broadcast %16 : vector<16x1xf32> to vector<16x32xf32>
    %18 = arith.subf %0, %17 : vector<16x32xf32>
    %19 = arith.mulf %18, %18 : vector<16x32xf32>
    %cst_16 = arith.constant dense<0.000000e+00> : vector<16xf32>
    %20 = vector.multi_reduction <add>, %19, %cst_16 [1] : vector<16x32xf32> to vector<16xf32>
    %21 = vector.shape_cast %20 : vector<16xf32> to vector<16x1xf32>
    %cst_17 = arith.constant 3.200000e+01 : f32
    %22 = vector.broadcast %cst_17 : f32 to vector<16x1xf32>
    %23 = arith.divf %21, %22 : vector<16x1xf32>
    %24 = vector.broadcast %16 : vector<16x1xf32> to vector<16x32xf32>
    %25 = arith.subf %0, %24 : vector<16x32xf32>
    %cst_18 = arith.constant 9.99999974E-6 : f32
    %26 = vector.broadcast %cst_18 : f32 to vector<16x1xf32>
    %27 = arith.addf %23, %26 : vector<16x1xf32>
    %28 = math.rsqrt %27 : vector<16x1xf32>
    %29 = vector.broadcast %28 : vector<16x1xf32> to vector<16x32xf32>
    %30 = arith.mulf %25, %29 : vector<16x32xf32>
    %31 = vector.broadcast %1 : vector<1x32xf32> to vector<16x32xf32>
    %32 = arith.mulf %30, %31 : vector<16x32xf32>
    %33 = vector.broadcast %2 : vector<1x32xf32> to vector<16x32xf32>
    %34 = arith.addf %32, %33 : vector<16x32xf32>
    %cst_19 = arith.constant dense<0.000000e+00> : vector<16x96xf32>
    %35 = tpu.matmul %34, %9, %cst_19 {dimension_numbers = #tpu.dot_dimension_numbers<[1], [0], [0], [1], [0, 0, 1, 1], [], []>} : vector<16x32xf32>, vector<32x96xf32>, vector<16x96xf32> -> vector<16x96xf32>
    %36 = vector.broadcast %5 : vector<1x96xf32> to vector<16x96xf32>
    %37 = arith.addf %35, %36 : vector<16x96xf32>
    %38 = vector.shape_cast %37 : vector<16x96xf32> to vector<2x8x96xf32>
    %39 = tpu.iota {dimensions = array<i32: 0>} : vector<8x8xi32>
    %40 = tpu.iota {dimensions = array<i32: 1>} : vector<8x8xi32>
    %41 = arith.cmpi sle, %40, %39 : vector<8x8xi32>
    %cst_20 = arith.constant 0.000000e+00 : f32
    %cst_21 = arith.constant -1.000000e+30 : f32
    %42 = vector.broadcast %cst_20 : f32 to vector<8x8xf32>
    %43 = vector.broadcast %cst_21 : f32 to vector<8x8xf32>
    %44 = arith.select %41, %42, %43 : vector<8x8xi1>, vector<8x8xf32>
    %45 = vector.extract_strided_slice %38 {offsets = [0, 0, 0], sizes = [2, 8, 8], strides = [1, 1, 1]} : vector<2x8x96xf32> to vector<2x8x8xf32>
    %46 = vector.extract_strided_slice %38 {offsets = [0, 0, 32], sizes = [2, 8, 8], strides = [1, 1, 1]} : vector<2x8x96xf32> to vector<2x8x8xf32>
    %47 = vector.extract_strided_slice %38 {offsets = [0, 0, 64], sizes = [2, 8, 8], strides = [1, 1, 1]} : vector<2x8x96xf32> to vector<2x8x8xf32>
    "tpu.trace_start"() <{level = 10 : i32, message = "btd,bsd->bts"}> : () -> ()
    %cst_22 = arith.constant dense<0.000000e+00> : vector<2x8x8xf32>
    %48 = tpu.matmul %45, %46, %cst_22 {dimension_numbers = #tpu.dot_dimension_numbers<[2], [2], [1], [1], [0, 0, 0, 1, 1, 1], [0], [0]>} : vector<2x8x8xf32>, vector<2x8x8xf32>, vector<2x8x8xf32> -> vector<2x8x8xf32>
    "tpu.trace_stop"() : () -> ()
    %cst_23 = arith.constant 0.353553385 : f32
    %49 = vector.broadcast %cst_23 : f32 to vector<2x8x8xf32>
    %50 = arith.mulf %48, %49 : vector<2x8x8xf32>
    %51 = vector.shape_cast %44 : vector<8x8xf32> to vector<1x8x8xf32>
    %52 = vector.broadcast %51 : vector<1x8x8xf32> to vector<2x8x8xf32>
    %53 = arith.addf %50, %52 : vector<2x8x8xf32>
    %cst_24 = arith.constant dense<0xFF800000> : vector<2x8xf32>
    %54 = vector.multi_reduction <maximumf>, %53, %cst_24 [2] : vector<2x8x8xf32> to vector<2x8xf32>
    %55 = vector.shape_cast %54 : vector<2x8xf32> to vector<2x8x1xf32>
    %56 = vector.broadcast %55 : vector<2x8x1xf32> to vector<2x8x8xf32>
    %57 = arith.subf %53, %56 : vector<2x8x8xf32>
    %58 = math.exp %57 : vector<2x8x8xf32>
    %cst_25 = arith.constant dense<0.000000e+00> : vector<2x8xf32>
    %59 = vector.multi_reduction <add>, %58, %cst_25 [2] : vector<2x8x8xf32> to vector<2x8xf32>
    %60 = vector.shape_cast %59 : vector<2x8xf32> to vector<2x8x1xf32>
    %61 = tpu.reciprocal %60 {approx = true} : vector<2x8x1xf32> -> vector<2x8x1xf32>
    %62 = arith.mulf %60, %61 : vector<2x8x1xf32>
    %cst_26 = arith.constant 2.000000e+00 : f32
    %63 = vector.broadcast %cst_26 : f32 to vector<2x8x1xf32>
    %64 = arith.subf %63, %62 : vector<2x8x1xf32>
    %65 = arith.mulf %61, %64 : vector<2x8x1xf32>
    "tpu.trace_start"() <{level = 10 : i32, message = "bts,bsd->btd"}> : () -> ()
    %cst_27 = arith.constant dense<0.000000e+00> : vector<2x8x8xf32>
    %66 = tpu.matmul %58, %47, %cst_27 {dimension_numbers = #tpu.dot_dimension_numbers<[2], [1], [1], [2], [0, 0, 0, 1, 1, 2], [0], [0]>} : vector<2x8x8xf32>, vector<2x8x8xf32>, vector<2x8x8xf32> -> vector<2x8x8xf32>
    "tpu.trace_stop"() : () -> ()
    %67 = vector.broadcast %65 : vector<2x8x1xf32> to vector<2x8x8xf32>
    %68 = arith.mulf %66, %67 : vector<2x8x8xf32>
    %69 = vector.extract_strided_slice %38 {offsets = [0, 0, 8], sizes = [2, 8, 8], strides = [1, 1, 1]} : vector<2x8x96xf32> to vector<2x8x8xf32>
    %70 = vector.extract_strided_slice %38 {offsets = [0, 0, 40], sizes = [2, 8, 8], strides = [1, 1, 1]} : vector<2x8x96xf32> to vector<2x8x8xf32>
    %71 = vector.extract_strided_slice %38 {offsets = [0, 0, 72], sizes = [2, 8, 8], strides = [1, 1, 1]} : vector<2x8x96xf32> to vector<2x8x8xf32>
    "tpu.trace_start"() <{level = 10 : i32, message = "btd,bsd->bts"}> : () -> ()
    %cst_28 = arith.constant dense<0.000000e+00> : vector<2x8x8xf32>
    %72 = tpu.matmul %69, %70, %cst_28 {dimension_numbers = #tpu.dot_dimension_numbers<[2], [2], [1], [1], [0, 0, 0, 1, 1, 1], [0], [0]>} : vector<2x8x8xf32>, vector<2x8x8xf32>, vector<2x8x8xf32> -> vector<2x8x8xf32>
    "tpu.trace_stop"() : () -> ()
    %cst_29 = arith.constant 0.353553385 : f32
    %73 = vector.broadcast %cst_29 : f32 to vector<2x8x8xf32>
    %74 = arith.mulf %72, %73 : vector<2x8x8xf32>
    %75 = vector.shape_cast %44 : vector<8x8xf32> to vector<1x8x8xf32>
    %76 = vector.broadcast %75 : vector<1x8x8xf32> to vector<2x8x8xf32>
    %77 = arith.addf %74, %76 : vector<2x8x8xf32>
    %cst_30 = arith.constant dense<0xFF800000> : vector<2x8xf32>
    %78 = vector.multi_reduction <maximumf>, %77, %cst_30 [2] : vector<2x8x8xf32> to vector<2x8xf32>
    %79 = vector.shape_cast %78 : vector<2x8xf32> to vector<2x8x1xf32>
    %80 = vector.broadcast %79 : vector<2x8x1xf32> to vector<2x8x8xf32>
    %81 = arith.subf %77, %80 : vector<2x8x8xf32>
    %82 = math.exp %81 : vector<2x8x8xf32>
    %cst_31 = arith.constant dense<0.000000e+00> : vector<2x8xf32>
    %83 = vector.multi_reduction <add>, %82, %cst_31 [2] : vector<2x8x8xf32> to vector<2x8xf32>
    %84 = vector.shape_cast %83 : vector<2x8xf32> to vector<2x8x1xf32>
    %85 = tpu.reciprocal %84 {approx = true} : vector<2x8x1xf32> -> vector<2x8x1xf32>
    %86 = arith.mulf %84, %85 : vector<2x8x1xf32>
    %cst_32 = arith.constant 2.000000e+00 : f32
    %87 = vector.broadcast %cst_32 : f32 to vector<2x8x1xf32>
    %88 = arith.subf %87, %86 : vector<2x8x1xf32>
    %89 = arith.mulf %85, %88 : vector<2x8x1xf32>
    "tpu.trace_start"() <{level = 10 : i32, message = "bts,bsd->btd"}> : () -> ()
    %cst_33 = arith.constant dense<0.000000e+00> : vector<2x8x8xf32>
    %90 = tpu.matmul %82, %71, %cst_33 {dimension_numbers = #tpu.dot_dimension_numbers<[2], [1], [1], [2], [0, 0, 0, 1, 1, 2], [0], [0]>} : vector<2x8x8xf32>, vector<2x8x8xf32>, vector<2x8x8xf32> -> vector<2x8x8xf32>
    "tpu.trace_stop"() : () -> ()
    %91 = vector.broadcast %89 : vector<2x8x1xf32> to vector<2x8x8xf32>
    %92 = arith.mulf %90, %91 : vector<2x8x8xf32>
    %93 = vector.extract_strided_slice %38 {offsets = [0, 0, 16], sizes = [2, 8, 8], strides = [1, 1, 1]} : vector<2x8x96xf32> to vector<2x8x8xf32>
    %94 = vector.extract_strided_slice %38 {offsets = [0, 0, 48], sizes = [2, 8, 8], strides = [1, 1, 1]} : vector<2x8x96xf32> to vector<2x8x8xf32>
    %95 = vector.extract_strided_slice %38 {offsets = [0, 0, 80], sizes = [2, 8, 8], strides = [1, 1, 1]} : vector<2x8x96xf32> to vector<2x8x8xf32>
    "tpu.trace_start"() <{level = 10 : i32, message = "btd,bsd->bts"}> : () -> ()
    %cst_34 = arith.constant dense<0.000000e+00> : vector<2x8x8xf32>
    %96 = tpu.matmul %93, %94, %cst_34 {dimension_numbers = #tpu.dot_dimension_numbers<[2], [2], [1], [1], [0, 0, 0, 1, 1, 1], [0], [0]>} : vector<2x8x8xf32>, vector<2x8x8xf32>, vector<2x8x8xf32> -> vector<2x8x8xf32>
    "tpu.trace_stop"() : () -> ()
    %cst_35 = arith.constant 0.353553385 : f32
    %97 = vector.broadcast %cst_35 : f32 to vector<2x8x8xf32>
    %98 = arith.mulf %96, %97 : vector<2x8x8xf32>
    %99 = vector.shape_cast %44 : vector<8x8xf32> to vector<1x8x8xf32>
    %100 = vector.broadcast %99 : vector<1x8x8xf32> to vector<2x8x8xf32>
    %101 = arith.addf %98, %100 : vector<2x8x8xf32>
    %cst_36 = arith.constant dense<0xFF800000> : vector<2x8xf32>
    %102 = vector.multi_reduction <maximumf>, %101, %cst_36 [2] : vector<2x8x8xf32> to vector<2x8xf32>
    %103 = vector.shape_cast %102 : vector<2x8xf32> to vector<2x8x1xf32>
    %104 = vector.broadcast %103 : vector<2x8x1xf32> to vector<2x8x8xf32>
    %105 = arith.subf %101, %104 : vector<2x8x8xf32>
    %106 = math.exp %105 : vector<2x8x8xf32>
    %cst_37 = arith.constant dense<0.000000e+00> : vector<2x8xf32>
    %107 = vector.multi_reduction <add>, %106, %cst_37 [2] : vector<2x8x8xf32> to vector<2x8xf32>
    %108 = vector.shape_cast %107 : vector<2x8xf32> to vector<2x8x1xf32>
    %109 = tpu.reciprocal %108 {approx = true} : vector<2x8x1xf32> -> vector<2x8x1xf32>
    %110 = arith.mulf %108, %109 : vector<2x8x1xf32>
    %cst_38 = arith.constant 2.000000e+00 : f32
    %111 = vector.broadcast %cst_38 : f32 to vector<2x8x1xf32>
    %112 = arith.subf %111, %110 : vector<2x8x1xf32>
    %113 = arith.mulf %109, %112 : vector<2x8x1xf32>
    "tpu.trace_start"() <{level = 10 : i32, message = "bts,bsd->btd"}> : () -> ()
    %cst_39 = arith.constant dense<0.000000e+00> : vector<2x8x8xf32>
    %114 = tpu.matmul %106, %95, %cst_39 {dimension_numbers = #tpu.dot_dimension_numbers<[2], [1], [1], [2], [0, 0, 0, 1, 1, 2], [0], [0]>} : vector<2x8x8xf32>, vector<2x8x8xf32>, vector<2x8x8xf32> -> vector<2x8x8xf32>
    "tpu.trace_stop"() : () -> ()
    %115 = vector.broadcast %113 : vector<2x8x1xf32> to vector<2x8x8xf32>
    %116 = arith.mulf %114, %115 : vector<2x8x8xf32>
    %117 = vector.extract_strided_slice %38 {offsets = [0, 0, 24], sizes = [2, 8, 8], strides = [1, 1, 1]} : vector<2x8x96xf32> to vector<2x8x8xf32>
    %118 = vector.extract_strided_slice %38 {offsets = [0, 0, 56], sizes = [2, 8, 8], strides = [1, 1, 1]} : vector<2x8x96xf32> to vector<2x8x8xf32>
    %119 = vector.extract_strided_slice %38 {offsets = [0, 0, 88], sizes = [2, 8, 8], strides = [1, 1, 1]} : vector<2x8x96xf32> to vector<2x8x8xf32>
    "tpu.trace_start"() <{level = 10 : i32, message = "btd,bsd->bts"}> : () -> ()
    %cst_40 = arith.constant dense<0.000000e+00> : vector<2x8x8xf32>
    %120 = tpu.matmul %117, %118, %cst_40 {dimension_numbers = #tpu.dot_dimension_numbers<[2], [2], [1], [1], [0, 0, 0, 1, 1, 1], [0], [0]>} : vector<2x8x8xf32>, vector<2x8x8xf32>, vector<2x8x8xf32> -> vector<2x8x8xf32>
    "tpu.trace_stop"() : () -> ()
    %cst_41 = arith.constant 0.353553385 : f32
    %121 = vector.broadcast %cst_41 : f32 to vector<2x8x8xf32>
    %122 = arith.mulf %120, %121 : vector<2x8x8xf32>
    %123 = vector.shape_cast %44 : vector<8x8xf32> to vector<1x8x8xf32>
    %124 = vector.broadcast %123 : vector<1x8x8xf32> to vector<2x8x8xf32>
    %125 = arith.addf %122, %124 : vector<2x8x8xf32>
    %cst_42 = arith.constant dense<0xFF800000> : vector<2x8xf32>
    %126 = vector.multi_reduction <maximumf>, %125, %cst_42 [2] : vector<2x8x8xf32> to vector<2x8xf32>
    %127 = vector.shape_cast %126 : vector<2x8xf32> to vector<2x8x1xf32>
    %128 = vector.broadcast %127 : vector<2x8x1xf32> to vector<2x8x8xf32>
    %129 = arith.subf %125, %128 : vector<2x8x8xf32>
    %130 = math.exp %129 : vector<2x8x8xf32>
    %cst_43 = arith.constant dense<0.000000e+00> : vector<2x8xf32>
    %131 = vector.multi_reduction <add>, %130, %cst_43 [2] : vector<2x8x8xf32> to vector<2x8xf32>
    %132 = vector.shape_cast %131 : vector<2x8xf32> to vector<2x8x1xf32>
    %133 = tpu.reciprocal %132 {approx = true} : vector<2x8x1xf32> -> vector<2x8x1xf32>
    %134 = arith.mulf %132, %133 : vector<2x8x1xf32>
    %cst_44 = arith.constant 2.000000e+00 : f32
    %135 = vector.broadcast %cst_44 : f32 to vector<2x8x1xf32>
    %136 = arith.subf %135, %134 : vector<2x8x1xf32>
    %137 = arith.mulf %133, %136 : vector<2x8x1xf32>
    "tpu.trace_start"() <{level = 10 : i32, message = "bts,bsd->btd"}> : () -> ()
    %cst_45 = arith.constant dense<0.000000e+00> : vector<2x8x8xf32>
    %138 = tpu.matmul %130, %119, %cst_45 {dimension_numbers = #tpu.dot_dimension_numbers<[2], [1], [1], [2], [0, 0, 0, 1, 1, 2], [0], [0]>} : vector<2x8x8xf32>, vector<2x8x8xf32>, vector<2x8x8xf32> -> vector<2x8x8xf32>
    "tpu.trace_stop"() : () -> ()
    %139 = vector.broadcast %137 : vector<2x8x1xf32> to vector<2x8x8xf32>
    %140 = arith.mulf %138, %139 : vector<2x8x8xf32>
    %141 = tpu.concatenate %68, %92, %116, %140 in 2 : vector<2x8x8xf32>, vector<2x8x8xf32>, vector<2x8x8xf32>, vector<2x8x8xf32> -> vector<2x8x32xf32>
    %142 = vector.shape_cast %141 : vector<2x8x32xf32> to vector<16x32xf32>
    %cst_46 = arith.constant dense<0.000000e+00> : vector<16x32xf32>
    %143 = tpu.matmul %142, %10, %cst_46 {dimension_numbers = #tpu.dot_dimension_numbers<[1], [0], [0], [1], [0, 0, 1, 1], [], []>} : vector<16x32xf32>, vector<32x32xf32>, vector<16x32xf32> -> vector<16x32xf32>
    %144 = vector.broadcast %6 : vector<1x32xf32> to vector<16x32xf32>
    %145 = arith.addf %143, %144 : vector<16x32xf32>
    %146 = arith.addf %145, %0 : vector<16x32xf32>
    %cst_47 = arith.constant dense<0.000000e+00> : vector<16xf32>
    %147 = vector.multi_reduction <add>, %146, %cst_47 [1] : vector<16x32xf32> to vector<16xf32>
    %148 = vector.shape_cast %147 : vector<16xf32> to vector<16x1xf32>
    %cst_48 = arith.constant 3.200000e+01 : f32
    %149 = vector.broadcast %cst_48 : f32 to vector<16x1xf32>
    %150 = arith.divf %148, %149 : vector<16x1xf32>
    %151 = vector.broadcast %150 : vector<16x1xf32> to vector<16x32xf32>
    %152 = arith.subf %146, %151 : vector<16x32xf32>
    %153 = arith.mulf %152, %152 : vector<16x32xf32>
    %cst_49 = arith.constant dense<0.000000e+00> : vector<16xf32>
    %154 = vector.multi_reduction <add>, %153, %cst_49 [1] : vector<16x32xf32> to vector<16xf32>
    %155 = vector.shape_cast %154 : vector<16xf32> to vector<16x1xf32>
    %cst_50 = arith.constant 3.200000e+01 : f32
    %156 = vector.broadcast %cst_50 : f32 to vector<16x1xf32>
    %157 = arith.divf %155, %156 : vector<16x1xf32>
    %158 = vector.broadcast %150 : vector<16x1xf32> to vector<16x32xf32>
    %159 = arith.subf %146, %158 : vector<16x32xf32>
    %cst_51 = arith.constant 9.99999974E-6 : f32
    %160 = vector.broadcast %cst_51 : f32 to vector<16x1xf32>
    %161 = arith.addf %157, %160 : vector<16x1xf32>
    %162 = math.rsqrt %161 : vector<16x1xf32>
    %163 = vector.broadcast %162 : vector<16x1xf32> to vector<16x32xf32>
    %164 = arith.mulf %159, %163 : vector<16x32xf32>
    %165 = vector.broadcast %3 : vector<1x32xf32> to vector<16x32xf32>
    %166 = arith.mulf %164, %165 : vector<16x32xf32>
    %167 = vector.broadcast %4 : vector<1x32xf32> to vector<16x32xf32>
    %168 = arith.addf %166, %167 : vector<16x32xf32>
    %cst_52 = arith.constant dense<0.000000e+00> : vector<16x128xf32>
    %169 = tpu.matmul %168, %11, %cst_52 {dimension_numbers = #tpu.dot_dimension_numbers<[1], [0], [0], [1], [0, 0, 1, 1], [], []>} : vector<16x32xf32>, vector<32x128xf32>, vector<16x128xf32> -> vector<16x128xf32>
    %170 = vector.broadcast %7 : vector<1x128xf32> to vector<16x128xf32>
    %171 = arith.addf %169, %170 : vector<16x128xf32>
    %cst_53 = arith.constant 0.000000e+00 : f32
    %172 = vector.broadcast %cst_53 : f32 to vector<16x128xf32>
    %173 = arith.maximumf %171, %172 : vector<16x128xf32>
    %cst_54 = arith.constant dense<0.000000e+00> : vector<16x32xf32>
    %174 = tpu.matmul %173, %12, %cst_54 {dimension_numbers = #tpu.dot_dimension_numbers<[1], [0], [0], [1], [0, 0, 1, 1], [], []>} : vector<16x128xf32>, vector<128x32xf32>, vector<16x32xf32> -> vector<16x32xf32>
    %175 = vector.broadcast %8 : vector<1x32xf32> to vector<16x32xf32>
    %176 = arith.addf %174, %175 : vector<16x32xf32>
    %177 = arith.addf %176, %146 : vector<16x32xf32>
    %c0_55 = arith.constant 0 : index
    %c0_56 = arith.constant 0 : index
    %178 = vector.load %arg3[%c0_55, %c0_56] : memref<16x32xf32, #tpu.memory_space<vmem>>, vector<16x32xf32>
    tpu.vector_store %arg3[%c0_55, %c0_56], %177 {strides = array<i32>} : memref<16x32xf32, #tpu.memory_space<vmem>>, vector<16x32xf32>,
    return
  }
}

</mosaic_0001>

<llo_original>
// kernel: tpu_custom_call.1
$region0: #{tpu_custom_call.1}
  #allocation0 [shape = 'u32[]', space=smem, size = 0x4, offset = 0x4, fixed_abs, tag = 'smem constant byte address 0x4 - core index']
  #allocation1 [shape = 'u32[144,128]{1,0:T(1,128)}', space=vmem, size = 0x12000, scoped, tag = 'internal scratch']
  %s0 = inlined_call_operand.hbm [shape: f32[16,32], index: 0, kind: input, shape index: {}]
  %s1 = inlined_call_operand.hbm [shape: f32[8,128], index: 1, kind: input, shape index: {}]
  %s2 = inlined_call_operand.hbm [shape: f32[224,128], index: 2, kind: input, shape index: {}]
  %s3 = inlined_call_operand.hbm [shape: f32[16,32], index: 3, kind: output, shape index: {}]
  %s4 = sld [smem:[#allocation0]]
  $region34: #{tpu_custom_call.1} parent=0
    _
  %s6 = ssub.s32 1, %s4
  %s7 = scalar_select 0, %s6, %s4
  $region1: #{tpu_custom_call.1} parent=0
    #allocation2 [shape = 'u8[8192]{0}', space=vmem, size = 0x2000, scoped, tag = 'input window, operand 0, single buffered']
    #allocation3 [shape = 's32[1]{0}', space=sflag, size = 0x4, scoped, tag = 'scoped memory for tpu_custom_call.1']
    #allocation4 [shape = 's32[1]{0}', space=sflag, size = 0x4, scoped, tag = 'scoped memory for tpu_custom_call.1']
    #allocation5 [shape = 'u8[4096]{0}', space=vmem, size = 0x1000, scoped, tag = 'input window, operand 1, single buffered']
    #allocation6 [shape = 's32[1]{0}', space=sflag, size = 0x4, scoped, tag = 'scoped memory for tpu_custom_call.1']
    #allocation7 [shape = 'u8[114688]{0}', space=vmem, size = 0x1c000, scoped, tag = 'input window, operand 2, single buffered']
    #allocation8 [shape = 'u8[8192]{0}', space=vmem, size = 0x2000, scoped, tag = 'output window, operand 0, single buffered']
    %8 = vsyncpa [#allocation3], 0
    %9 = vsyncpa [#allocation6], 0
    %10 = vsyncpa [#allocation4], 0
    // Predicated region
    $region2: #{tpu_custom_call.1} parent=1 // pred_check
      _
    $region3: #{tpu_custom_call.1} parent=1 // pred_check_branch
      %12 = sbr.rel (0) target = $region5
    $region4: #{tpu_custom_call.1} parent=1 // pred_region
      %s14 = ssub.s32 256, 256
      %15 = vsyncadd [#allocation3], %s14
      %s16 = sshll.u32 [#allocation2], 4
      %s17 = int_to_ptr.vmem [resolvable:$true] %s16
      %22 = dma.hbm_to_vmem [thread:$0]  %s0, 256, %s17, [#allocation3], 128, 128, 8
    $region5: #{tpu_custom_call.1} parent=1 // pred_fallthru
      _
    // Predicated region
    $region6: #{tpu_custom_call.1} parent=1 // pred_check
      _
    $region7: #{tpu_custom_call.1} parent=1 // pred_check_branch
      %24 = sbr.rel (0) target = $region9
    $region8: #{tpu_custom_call.1} parent=1 // pred_region
      %s26 = ssub.s32 128, 128
      %27 = vsyncadd [#allocation6], %s26
      %s29 = sshll.u32 [#allocation5], 4
      %s30 = int_to_ptr.vmem [resolvable:$true] %s29
      %32 = dma.hbm_to_vmem [thread:$0]  %s1, 128, %s30, [#allocation6]
    $region9: #{tpu_custom_call.1} parent=1 // pred_fallthru
      _
    // Predicated region
    $region10: #{tpu_custom_call.1} parent=1 // pred_check
      _
    $region11: #{tpu_custom_call.1} parent=1 // pred_check_branch
      %34 = sbr.rel (0) target = $region13
    $region12: #{tpu_custom_call.1} parent=1 // pred_region
      %s36 = ssub.s32 3584, 3584
      %37 = vsyncadd [#allocation6], %s36
      %s38 = sshll.u32 [#allocation7], 4
      %s39 = int_to_ptr.vmem [resolvable:$true] %s38
      %44 = dma.hbm_to_vmem [thread:$0]  %s2, 3584, %s39, [#allocation6], 128, 128, 8
    $region13: #{tpu_custom_call.1} parent=1 // pred_fallthru
      _
    // Predicated region
    $region14: #{tpu_custom_call.1} parent=1 // pred_check
      _
    $region15: #{tpu_custom_call.1} parent=1 // pred_check_branch
      %46 = sbr.rel (0) target = $region17
    $region16: #{tpu_custom_call.1} parent=1 // pred_region
      %47 = dma.done [#allocation3], 256
    $region17: #{tpu_custom_call.1} parent=1 // pred_fallthru
      _
    // Predicated region
    $region18: #{tpu_custom_call.1} parent=1 // pred_check
      _
    $region19: #{tpu_custom_call.1} parent=1 // pred_check_branch
      %49 = sbr.rel (0) target = $region21
    $region20: #{tpu_custom_call.1} parent=1 // pred_region
      %50 = dma.done [#allocation6], 128
    $region21: #{tpu_custom_call.1} parent=1 // pred_fallthru
      _
    // Predicated region
    $region22: #{tpu_custom_call.1} parent=1 // pred_check
      _
    $region23: #{tpu_custom_call.1} parent=1 // pred_check_branch
      %52 = sbr.rel (0) target = $region25
    $region24: #{tpu_custom_call.1} parent=1 // pred_region
      %53 = dma.done [#allocation6], 3584
    $region25: #{tpu_custom_call.1} parent=1 // pred_fallthru
      _
    %v54 = vld [vmem:[#allocation2] sm:$0xff]
    %v55 = vld [vmem:[#allocation2 + $0x8] sm:$0xff]
    %v56 = vld [vmem:[#allocation5] sm:$0x1]
    %v57 = vld [vmem:[#allocation5 + $0x1] sm:$0x1]
    %v58 = vld [vmem:[#allocation5 + $0x2] sm:$0x1]
    %v59 = vld [vmem:[#allocation5 + $0x3] sm:$0x1]
    %v60 = vld [vmem:[#allocation5 + $0x4] sm:$0x1]
    %v61 = vld [vmem:[#allocation5 + $0x5] sm:$0x1]
    %v62 = vld [vmem:[#allocation5 + $0x6] sm:$0x1]
    %v63 = vld [vmem:[#allocation5 + $0x7] sm:$0x1]
    %v64 = vld [vmem:[#allocation7] sm:$0xff]
    %v65 = vld [vmem:[#allocation7 + $0x8] sm:$0xff]
    %v66 = vld [vmem:[#allocation7 + $0x10] sm:$0xff]
    %v67 = vld [vmem:[#allocation7 + $0x18] sm:$0xff]
    %v68 = vld [vmem:[#allocation7 + $0x20] sm:$0xff]
    %v69 = vld [vmem:[#allocation7 + $0x28] sm:$0xff]
    %v70 = vld [vmem:[#allocation7 + $0x30] sm:$0xff]
    %v71 = vld [vmem:[#allocation7 + $0x38] sm:$0xff]
    %v72 = vld [vmem:[#allocation7 + $0x40] sm:$0xff]
    %v73 = vld [vmem:[#allocation7 + $0x48] sm:$0xff]
    %v74 = vld [vmem:[#allocation7 + $0x50] sm:$0xff]
    %v75 = vld [vmem:[#allocation7 + $0x58] sm:$0xff]
    %v76 = vld [vmem:[#allocation7 + $0x60] sm:$0xff]
    %v77 = vld [vmem:[#allocation7 + $0x68] sm:$0xff]
    %v78 = vld [vmem:[#allocation7 + $0x70] sm:$0xff]
    %v79 = vld [vmem:[#allocation7 + $0x78] sm:$0xff]
    %v80 = vld [vmem:[#allocation7 + $0x80] sm:$0xff]
    %v81 = vld [vmem:[#allocation7 + $0x88] sm:$0xff]
    %v82 = vld [vmem:[#allocation7 + $0x90] sm:$0xff]
    %v83 = vld [vmem:[#allocation7 + $0x98] sm:$0xff]
    %v84 = vld [vmem:[#allocation7 + $0xa0] sm:$0xff]
    %v85 = vld [vmem:[#allocation7 + $0xa8] sm:$0xff]
    %v86 = vld [vmem:[#allocation7 + $0xb0] sm:$0xff]
    %v87 = vld [vmem:[#allocation7 + $0xb8] sm:$0xff]
    %v88 = vld [vmem:[#allocation7 + $0xc0] sm:$0xff]
    %v89 = vld [vmem:[#allocation7 + $0xc8] sm:$0xff]
    %v90 = vld [vmem:[#allocation7 + $0xd0] sm:$0xff]
    %v91 = vld [vmem:[#allocation7 + $0xd8] sm:$0xff]
    %vm92 = vcmask 261120
    %v93 = vsel %vm92, %v54, 0.0
    %94 = vadd.xlane.f32.xlu0 %v93
    %v95 = vpop.xlane.xlu0 %94
    %v96 = vsel %vm92, %v55, 0.0
    %97 = vadd.xlane.f32.xlu0 %v96
    %v98 = vpop.xlane.xlu0 %97
    %v99 = vrcp.pop 32.0
    %v100 = vmul.f32 %v95, %v99
    %v101 = vmul.f32 %v98, %v99
    %v102 = vsub.f32 %v54, %v100
    %v103 = vsub.f32 %v55, %v101
    %v104 = vmul.f32 %v102, %v102
    %v105 = vmul.f32 %v103, %v103
    %v106 = vsel %vm92, %v104, 0.0
    %107 = vadd.xlane.f32.xlu0 %v106
    %v108 = vpop.xlane.xlu0 %107
    %v109 = vsel %vm92, %v105, 0.0
    %110 = vadd.xlane.f32.xlu0 %v109
    %v111 = vpop.xlane.xlu0 %110
    %v112 = vmul.f32 %v108, %v99
    %v113 = vmul.f32 %v111, %v99
    %v114 = vadd.f32 %v112, 1e-05
    %v115 = vadd.f32 %v113, 1e-05
    %v116 = vrsqrt.pop %v114
    %v117 = vrsqrt.pop %v115
    %v118 = vmul.f32 %v102, %v116
    %v119 = vmul.f32 %v103, %v117
    %v120 = vlaneseq
    %v121 = vshrl.u32 %v120, 7
    %v122 = vsub.s32 0, %v121
    %v123 = vrot.slane %v56, %v122
    %v124 = vmul.f32 %v118, %v123
    %v125 = vmul.f32 %v119, %v123
    %v126 = vlaneseq
    %v127 = vshrl.u32 %v126, 7
    %v128 = vsub.s32 0, %v127
    %v129 = vrot.slane %v57, %v128
    %v130 = vadd.f32 %v124, %v129
    %v131 = vadd.f32 %v125, %v129
    %v132 = vlaneseq
    %v133 = vshrl.u32 %v132, 7
    %v134 = vsub.s32 0, %v133
    %v135 = vrot.slane %v60, %v134
    %v137 = vsel %vm92, %v130, 0
    %v140 = vsel %vm92, %v131, 0
    %142 = vmatprep.subr.mxu0 0.0
    %143 = vmatpush1.msra.mxu0 %v64
    %144 = vmatprep.subr.mxu0 0.0
    %145 = vmatpush1.msra.mxu0 %v65
    %146 = vmatprep.subr.mxu0 0.0
    %147 = vmatpush1.msra.mxu0 %v66
    %148 = vmatprep.subr.mxu0 0.0
    %149 = vmatpush1.msra.mxu0 %v67
    %150 = vmatprep.subr.mxu0 0.0
    %151 = vmatpush1.msra.mxu0 0.0
    %152 = vmatprep.subr.mxu0 0.0
    %153 = vmatpush1.msra.mxu0 0.0
    %154 = vmatprep.subr.mxu0 0.0
    %155 = vmatpush1.msra.mxu0 0.0
    %156 = vmatprep.subr.mxu0 0.0
    %157 = vmatpush1.msra.mxu0 0.0
    %158 = vmatprep.subr.mxu0 0.0
    %159 = vmatpush1.msra.mxu0 0.0
    %160 = vmatprep.subr.mxu0 0.0
    %161 = vmatpush1.msra.mxu0 0.0
    %162 = vmatprep.subr.mxu0 0.0
    %163 = vmatpush1.msra.mxu0 0.0
    %164 = vmatprep.subr.mxu0 0.0
    %165 = vmatpush1.msra.mxu0 0.0
    %166 = vmatprep.subr.mxu0 0.0
    %167 = vmatpush1.msra.mxu0 0.0
    %168 = vmatprep.subr.mxu0 0.0
    %169 = vmatpush1.msra.mxu0 0.0
    %170 = vmatprep.subr.mxu0 0.0
    %171 = vmatpush1.msra.mxu0 0.0
    %172 = vmatprep.subr.mxu0 0.0
    %173 = vmatpush1.msra.mxu0 0.0
    %174 = vmatprep.subr.mxu0 0.0
    %175 = vmatpush1.msra.mxu0 0.0
    %176 = vmatprep.subr.mxu0 0.0
    %177 = vmatpush1.msra.mxu0 0.0
    %178 = vmatprep.subr.mxu0 0.0
    %179 = vmatpush1.msra.mxu0 0.0
    %180 = vmatprep.subr.mxu0 0.0
    %181 = vmatpush1.msra.mxu0 0.0
    %182 = vmatprep.subr.mxu0 0.0
    %183 = vmatpush1.msra.mxu0 0.0
    %184 = vmatprep.subr.mxu0 0.0
    %185 = vmatpush1.msra.mxu0 0.0
    %186 = vmatprep.subr.mxu0 0.0
    %187 = vmatpush1.msra.mxu0 0.0
    %188 = vmatprep.subr.mxu0 0.0
    %189 = vmatpush1.msra.mxu0 0.0
    %190 = vmatprep.subr.mxu0 0.0
    %191 = vmatpush1.msra.mxu0 0.0
    %192 = vmatprep.subr.mxu0 0.0
    %193 = vmatpush1.msra.mxu0 0.0
    %194 = vmatprep.subr.mxu0 0.0
    %195 = vmatpush1.msra.mxu0 0.0
    %196 = vmatprep.subr.mxu0 0.0
    %197 = vmatpush1.msra.mxu0 0.0
    %198 = vmatprep.subr.mxu0 0.0
    %199 = vmatpush1.msra.mxu0 0.0
    %200 = vmatprep.subr.mxu0 0.0
    %201 = vmatpush1.msra.mxu0 0.0
    %202 = vmatprep.subr.mxu0 0.0
    %203 = vmatpush1.msra.mxu0 0.0
    %204 = vmatprep.subr.mxu0 0.0
    %205 = vmatpush1.msra.mxu0 0.0
    %206 = vmatprep.mubr.f32.mxu0 0.0
    %207 = vmatmul.mubr.f32.gmra.mrb[0].mxu0 %v137
    %v208 = vpop.f32.mrb[0].mxu0
    %v209 = vadd.f32 %v135, %v208
    %v210 = vpop.f32.mrb[0].mxu0
    %211 = vmatprep.mubr.f32.mxu0 0.0
    %212 = vmatmul.mubr.f32.gmra.mrb[0].mxu0 %v140
    %v213 = vpop.f32.mrb[0].mxu0
    %v214 = vadd.f32 %v135, %v213
    %v215 = vpop.f32.mrb[0].mxu0
    %216 = vdwg.mxu0
    %v217 = vlaneseq
    %v218 = vshrl.u32 %v217, 7
    %v219 = vlaneseq
    %v220 = vand.u32 %v219, 127
    %vm221 = vcmp.le.s32.totalorder %v220, %v218
    %v222 = vsel %vm221, 0.0, -1e+30
    %224 = vrot.lane.b32.xlu0 %v209, 96
    %v225 = vpop.permute.xlu0 %224
    %vm226 = vcmask 64512
    %v227 = vsel %vm226, %v209, 0
    %v229 = vsel %vm226, %v225, 0
    %231 = vmatprep.subr.mxu0 0.0
    %232 = vmatpush1.xpose.msra.mxu0 %v229
    %233 = vmatprep.subr.mxu0 0.0
    %234 = vmatpush1.xpose.msra.mxu0 0.0
    %235 = vmatprep.subr.mxu0 0.0
    %236 = vmatpush1.xpose.msra.mxu0 0.0
    %237 = vmatprep.subr.mxu0 0.0
    %238 = vmatpush1.xpose.msra.mxu0 0.0
    %239 = vmatprep.subr.mxu0 0.0
    %240 = vmatpush1.xpose.msra.mxu0 0.0
    %241 = vmatprep.subr.mxu0 0.0
    %242 = vmatpush1.xpose.msra.mxu0 0.0
    %243 = vmatprep.subr.mxu0 0.0
    %244 = vmatpush1.xpose.msra.mxu0 0.0
    %245 = vmatprep.subr.mxu0 0.0
    %246 = vmatpush1.xpose.msra.mxu0 0.0
    %247 = vmatprep.subr.mxu0 0.0
    %248 = vmatpush1.xpose.msra.mxu0 0.0
    %249 = vmatprep.subr.mxu0 0.0
    %250 = vmatpush1.xpose.msra.mxu0 0.0
    %251 = vmatprep.subr.mxu0 0.0
    %252 = vmatpush1.xpose.msra.mxu0 0.0
    %253 = vmatprep.subr.mxu0 0.0
    %254 = vmatpush1.xpose.msra.mxu0 0.0
    %255 = vmatprep.subr.mxu0 0.0
    %256 = vmatpush1.xpose.msra.mxu0 0.0
    %257 = vmatprep.subr.mxu0 0.0
    %258 = vmatpush1.xpose.msra.mxu0 0.0
    %259 = vmatprep.subr.mxu0 0.0
    %260 = vmatpush1.xpose.msra.mxu0 0.0
    %261 = vmatprep.subr.mxu0 0.0
    %262 = vmatpush1.xpose.msra.mxu0 0.0
    %263 = vmatprep.subr.mxu0 0.0
    %264 = vmatpush1.xpose.msra.mxu0 0.0
    %265 = vmatprep.subr.mxu0 0.0
    %266 = vmatpush1.xpose.msra.mxu0 0.0
    %267 = vmatprep.subr.mxu0 0.0
    %268 = vmatpush1.xpose.msra.mxu0 0.0
    %269 = vmatprep.subr.mxu0 0.0
    %270 = vmatpush1.xpose.msra.mxu0 0.0
    %271 = vmatprep.subr.mxu0 0.0
    %272 = vmatpush1.xpose.msra.mxu0 0.0
    %273 = vmatprep.subr.mxu0 0.0
    %274 = vmatpush1.xpose.msra.mxu0 0.0
    %275 = vmatprep.subr.mxu0 0.0
    %276 = vmatpush1.xpose.msra.mxu0 0.0
    %277 = vmatprep.subr.mxu0 0.0
    %278 = vmatpush1.xpose.msra.mxu0 0.0
    %279 = vmatprep.subr.mxu0 0.0
    %280 = vmatpush1.xpose.msra.mxu0 0.0
    %281 = vmatprep.subr.mxu0 0.0
    %282 = vmatpush1.xpose.msra.mxu0 0.0
    %283 = vmatprep.subr.mxu0 0.0
    %284 = vmatpush1.xpose.msra.mxu0 0.0
    %285 = vmatprep.subr.mxu0 0.0
    %286 = vmatpush1.xpose.msra.mxu0 0.0
    %287 = vmatprep.subr.mxu0 0.0
    %288 = vmatpush1.xpose.msra.mxu0 0.0
    %289 = vmatprep.subr.mxu0 0.0
    %290 = vmatpush1.xpose.msra.mxu0 0.0
    %291 = vmatprep.subr.mxu0 0.0
    %292 = vmatpush1.xpose.msra.mxu0 0.0
    %293 = vmatprep.subr.mxu0 0.0
    %294 = vmatpush1.xpose.msra.mxu0 0.0
    %295 = vmatprep.mubr.f32.mxu0 0.0
    %296 = vmatmul.mubr.f32.gmra.mrb[0].mxu0 %v227
    %v297 = vpop.f32.mrb[0].mxu0
    %v298 = vadd.f32 0.0, %v297
    %v299 = vpop.f32.mrb[0].mxu0
    %300 = vdwg.mxu0
    %302 = vrot.lane.b32.xlu0 %v214, 96
    %v303 = vpop.permute.xlu0 %302
    %v304 = vsel %vm226, %v214, 0
    %v306 = vsel %vm226, %v303, 0
    %308 = vmatprep.subr.mxu0 0.0
    %309 = vmatpush1.xpose.msra.mxu0 %v306
    %310 = vmatprep.subr.mxu0 0.0
    %311 = vmatpush1.xpose.msra.mxu0 0.0
    %312 = vmatprep.subr.mxu0 0.0
    %313 = vmatpush1.xpose.msra.mxu0 0.0
    %314 = vmatprep.subr.mxu0 0.0
    %315 = vmatpush1.xpose.msra.mxu0 0.0
    %316 = vmatprep.subr.mxu0 0.0
    %317 = vmatpush1.xpose.msra.mxu0 0.0
    %318 = vmatprep.subr.mxu0 0.0
    %319 = vmatpush1.xpose.msra.mxu0 0.0
    %320 = vmatprep.subr.mxu0 0.0
    %321 = vmatpush1.xpose.msra.mxu0 0.0
    %322 = vmatprep.subr.mxu0 0.0
    %323 = vmatpush1.xpose.msra.mxu0 0.0
    %324 = vmatprep.subr.mxu0 0.0
    %325 = vmatpush1.xpose.msra.mxu0 0.0
    %326 = vmatprep.subr.mxu0 0.0
    %327 = vmatpush1.xpose.msra.mxu0 0.0
    %328 = vmatprep.subr.mxu0 0.0
    %329 = vmatpush1.xpose.msra.mxu0 0.0
    %330 = vmatprep.subr.mxu0 0.0
    %331 = vmatpush1.xpose.msra.mxu0 0.0
    %332 = vmatprep.subr.mxu0 0.0
    %333 = vmatpush1.xpose.msra.mxu0 0.0
    %334 = vmatprep.subr.mxu0 0.0
    %335 = vmatpush1.xpose.msra.mxu0 0.0
    %336 = vmatprep.subr.mxu0 0.0
    %337 = vmatpush1.xpose.msra.mxu0 0.0
    %338 = vmatprep.subr.mxu0 0.0
    %339 = vmatpush1.xpose.msra.mxu0 0.0
    %340 = vmatprep.subr.mxu0 0.0
    %341 = vmatpush1.xpose.msra.mxu0 0.0
    %342 = vmatprep.subr.mxu0 0.0
    %343 = vmatpush1.xpose.msra.mxu0 0.0
    %344 = vmatprep.subr.mxu0 0.0
    %345 = vmatpush1.xpose.msra.mxu0 0.0
    %346 = vmatprep.subr.mxu0 0.0
    %347 = vmatpush1.xpose.msra.mxu0 0.0
    %348 = vmatprep.subr.mxu0 0.0
    %349 = vmatpush1.xpose.msra.mxu0 0.0
    %350 = vmatprep.subr.mxu0 0.0
    %351 = vmatpush1.xpose.msra.mxu0 0.0
    %352 = vmatprep.subr.mxu0 0.0
    %353 = vmatpush1.xpose.msra.mxu0 0.0
    %354 = vmatprep.subr.mxu0 0.0
    %355 = vmatpush1.xpose.msra.mxu0 0.0
    %356 = vmatprep.subr.mxu0 0.0
    %357 = vmatpush1.xpose.msra.mxu0 0.0
    %358 = vmatprep.subr.mxu0 0.0
    %359 = vmatpush1.xpose.msra.mxu0 0.0
    %360 = vmatprep.subr.mxu0 0.0
    %361 = vmatpush1.xpose.msra.mxu0 0.0
    %362 = vmatprep.subr.mxu0 0.0
    %363 = vmatpush1.xpose.msra.mxu0 0.0
    %364 = vmatprep.subr.mxu0 0.0
    %365 = vmatpush1.xpose.msra.mxu0 0.0
    %366 = vmatprep.subr.mxu0 0.0
    %367 = vmatpush1.xpose.msra.mxu0 0.0
    %368 = vmatprep.subr.mxu0 0.0
    %369 = vmatpush1.xpose.msra.mxu0 0.0
    %370 = vmatprep.subr.mxu0 0.0
    %371 = vmatpush1.xpose.msra.mxu0 0.0
    %372 = vmatprep.mubr.f32.mxu0 0.0
    %373 = vmatmul.mubr.f32.gmra.mrb[0].mxu0 %v304
    %v374 = vpop.f32.mrb[0].mxu0
    %v375 = vadd.f32 0.0, %v374
    %v376 = vpop.f32.mrb[0].mxu0
    %377 = vdwg.mxu0
    %v378 = vmul.f32 %v298, 0.35355338
    %v379 = vmul.f32 %v375, 0.35355338
    %v380 = vadd.f32 %v378, %v222
    %v381 = vadd.f32 %v379, %v222
    %v382 = vsel %vm226, %v380, -inf
    %383 = vmax.xlane.f32.xlu0 %v382
    %v384 = vpop.xlane.xlu0 %383
    %v385 = vsel %vm226, %v381, -inf
    %386 = vmax.xlane.f32.xlu0 %v385
    %v387 = vpop.xlane.xlu0 %386
    %v388 = vsub.f32 %v380, %v384
    %v389 = vsub.f32 %v381, %v387
    %v390 = vmul.f32 %v388, 1.442695
    %v391 = vpow.pop %v390
    %v392 = vmul.f32 %v389, 1.442695
    %v393 = vpow.pop %v392
    %v394 = vsel %vm226, %v391, 0.0
    %395 = vadd.xlane.f32.xlu0 %v394
    %v396 = vpop.xlane.xlu0 %395
    %v397 = vsel %vm226, %v393, 0.0
    %398 = vadd.xlane.f32.xlu0 %v397
    %v399 = vpop.xlane.xlu0 %398
    %v400 = vrcp.pop %v396
    %v401 = vrcp.pop %v399
    %v402 = vmul.f32 %v396, %v400
    %v403 = vmul.f32 %v399, %v401
    %v404 = vsub.f32 2.0, %v402
    %v405 = vsub.f32 2.0, %v403
    %v406 = vmul.f32 %v400, %v404
    %v407 = vmul.f32 %v401, %v405
    %408 = vrot.lane.b32.xlu0 %v209, 64
    %v409 = vpop.permute.xlu0 %408
    %v412 = vsel %vm226, %v391, 0
    %414 = vmatprep.subr.mxu0 0.0
    %415 = vmatpush1.msra.mxu0 %v409
    %416 = vmatprep.subr.mxu0 0.0
    %417 = vmatpush1.msra.mxu0 0.0
    %418 = vmatprep.subr.mxu0 0.0
    %419 = vmatpush1.msra.mxu0 0.0
    %420 = vmatprep.subr.mxu0 0.0
    %421 = vmatpush1.msra.mxu0 0.0
    %422 = vmatprep.subr.mxu0 0.0
    %423 = vmatpush1.msra.mxu0 0.0
    %424 = vmatprep.subr.mxu0 0.0
    %425 = vmatpush1.msra.mxu0 0.0
    %426 = vmatprep.subr.mxu0 0.0
    %427 = vmatpush1.msra.mxu0 0.0
    %428 = vmatprep.subr.mxu0 0.0
    %429 = vmatpush1.msra.mxu0 0.0
    %430 = vmatprep.subr.mxu0 0.0
    %431 = vmatpush1.msra.mxu0 0.0
    %432 = vmatprep.subr.mxu0 0.0
    %433 = vmatpush1.msra.mxu0 0.0
    %434 = vmatprep.subr.mxu0 0.0
    %435 = vmatpush1.msra.mxu0 0.0
    %436 = vmatprep.subr.mxu0 0.0
    %437 = vmatpush1.msra.mxu0 0.0
    %438 = vmatprep.subr.mxu0 0.0
    %439 = vmatpush1.msra.mxu0 0.0
    %440 = vmatprep.subr.mxu0 0.0
    %441 = vmatpush1.msra.mxu0 0.0
    %442 = vmatprep.subr.mxu0 0.0
    %443 = vmatpush1.msra.mxu0 0.0
    %444 = vmatprep.subr.mxu0 0.0
    %445 = vmatpush1.msra.mxu0 0.0
    %446 = vmatprep.subr.mxu0 0.0
    %447 = vmatpush1.msra.mxu0 0.0
    %448 = vmatprep.subr.mxu0 0.0
    %449 = vmatpush1.msra.mxu0 0.0
    %450 = vmatprep.subr.mxu0 0.0
    %451 = vmatpush1.msra.mxu0 0.0
    %452 = vmatprep.subr.mxu0 0.0
    %453 = vmatpush1.msra.mxu0 0.0
    %454 = vmatprep.subr.mxu0 0.0
    %455 = vmatpush1.msra.mxu0 0.0
    %456 = vmatprep.subr.mxu0 0.0
    %457 = vmatpush1.msra.mxu0 0.0
    %458 = vmatprep.subr.mxu0 0.0
    %459 = vmatpush1.msra.mxu0 0.0
    %460 = vmatprep.subr.mxu0 0.0
    %461 = vmatpush1.msra.mxu0 0.0
    %462 = vmatprep.subr.mxu0 0.0
    %463 = vmatpush1.msra.mxu0 0.0
    %464 = vmatprep.subr.mxu0 0.0
    %465 = vmatpush1.msra.mxu0 0.0
    %466 = vmatprep.subr.mxu0 0.0
    %467 = vmatpush1.msra.mxu0 0.0
    %468 = vmatprep.subr.mxu0 0.0
    %469 = vmatpush1.msra.mxu0 0.0
    %470 = vmatprep.subr.mxu0 0.0
    %471 = vmatpush1.msra.mxu0 0.0
    %472 = vmatprep.subr.mxu0 0.0
    %473 = vmatpush1.msra.mxu0 0.0
    %474 = vmatprep.subr.mxu0 0.0
    %475 = vmatpush1.msra.mxu0 0.0
    %476 = vmatprep.subr.mxu0 0.0
    %477 = vmatpush1.msra.mxu0 0.0
    %478 = vmatprep.mubr.f32.mxu0 0.0
    %479 = vmatmul.mubr.f32.gmra.mrb[0].mxu0 %v412
    %v480 = vpop.f32.mrb[0].mxu0
    %v481 = vadd.f32 0.0, %v480
    %v482 = vpop.f32.mrb[0].mxu0
    %483 = vdwg.mxu0
    %484 = vrot.lane.b32.xlu0 %v214, 64
    %v485 = vpop.permute.xlu0 %484
    %v488 = vsel %vm226, %v393, 0
    %490 = vmatprep.subr.mxu0 0.0
    %491 = vmatpush1.msra.mxu0 %v485
    %492 = vmatprep.subr.mxu0 0.0
    %493 = vmatpush1.msra.mxu0 0.0
    %494 = vmatprep.subr.mxu0 0.0
    %495 = vmatpush1.msra.mxu0 0.0
    %496 = vmatprep.subr.mxu0 0.0
    %497 = vmatpush1.msra.mxu0 0.0
    %498 = vmatprep.subr.mxu0 0.0
    %499 = vmatpush1.msra.mxu0 0.0
    %500 = vmatprep.subr.mxu0 0.0
    %501 = vmatpush1.msra.mxu0 0.0
    %502 = vmatprep.subr.mxu0 0.0
    %503 = vmatpush1.msra.mxu0 0.0
    %504 = vmatprep.subr.mxu0 0.0
    %505 = vmatpush1.msra.mxu0 0.0
    %506 = vmatprep.subr.mxu0 0.0
    %507 = vmatpush1.msra.mxu0 0.0
    %508 = vmatprep.subr.mxu0 0.0
    %509 = vmatpush1.msra.mxu0 0.0
    %510 = vmatprep.subr.mxu0 0.0
    %511 = vmatpush1.msra.mxu0 0.0
    %512 = vmatprep.subr.mxu0 0.0
    %513 = vmatpush1.msra.mxu0 0.0
    %514 = vmatprep.subr.mxu0 0.0
    %515 = vmatpush1.msra.mxu0 0.0
    %516 = vmatprep.subr.mxu0 0.0
    %517 = vmatpush1.msra.mxu0 0.0
    %518 = vmatprep.subr.mxu0 0.0
    %519 = vmatpush1.msra.mxu0 0.0
    %520 = vmatprep.subr.mxu0 0.0
    %521 = vmatpush1.msra.mxu0 0.0
    %522 = vmatprep.subr.mxu0 0.0
    %523 = vmatpush1.msra.mxu0 0.0
    %524 = vmatprep.subr.mxu0 0.0
    %525 = vmatpush1.msra.mxu0 0.0
    %526 = vmatprep.subr.mxu0 0.0
    %527 = vmatpush1.msra.mxu0 0.0
    %528 = vmatprep.subr.mxu0 0.0
    %529 = vmatpush1.msra.mxu0 0.0
    %530 = vmatprep.subr.mxu0 0.0
    %531 = vmatpush1.msra.mxu0 0.0
    %532 = vmatprep.subr.mxu0 0.0
    %533 = vmatpush1.msra.mxu0 0.0
    %534 = vmatprep.subr.mxu0 0.0
    %535 = vmatpush1.msra.mxu0 0.0
    %536 = vmatprep.subr.mxu0 0.0
    %537 = vmatpush1.msra.mxu0 0.0
    %538 = vmatprep.subr.mxu0 0.0
    %539 = vmatpush1.msra.mxu0 0.0
    %540 = vmatprep.subr.mxu0 0.0
    %541 = vmatpush1.msra.mxu0 0.0
    %542 = vmatprep.subr.mxu0 0.0
    %543 = vmatpush1.msra.mxu0 0.0
    %544 = vmatprep.subr.mxu0 0.0
    %545 = vmatpush1.msra.mxu0 0.0
    %546 = vmatprep.subr.mxu0 0.0
    %547 = vmatpush1.msra.mxu0 0.0
    %548 = vmatprep.subr.mxu0 0.0
    %549 = vmatpush1.msra.mxu0 0.0
    %550 = vmatprep.subr.mxu0 0.0
    %551 = vmatpush1.msra.mxu0 0.0
    %552 = vmatprep.subr.mxu0 0.0
    %553 = vmatpush1.msra.mxu0 0.0
    %554 = vmatprep.mubr.f32.mxu0 0.0
    %555 = vmatmul.mubr.f32.gmra.mrb[0].mxu0 %v488
    %v556 = vpop.f32.mrb[0].mxu0
    %v557 = vadd.f32 0.0, %v556
    %v558 = vpop.f32.mrb[0].mxu0
    %559 = vdwg.mxu0
    %v560 = vmul.f32 %v481, %v406
    %v561 = vmul.f32 %v557, %v407
    %562 = vrot.lane.b32.xlu0 %v209, 120
    %v563 = vpop.permute.xlu0 %562
    %564 = vrot.lane.b32.xlu0 %v209, 88
    %v565 = vpop.permute.xlu0 %564
    %v566 = vsel %vm226, %v563, 0
    %v568 = vsel %vm226, %v565, 0
    %570 = vmatprep.subr.mxu0 0.0
    %571 = vmatpush1.xpose.msra.mxu0 %v568
    %572 = vmatprep.subr.mxu0 0.0
    %573 = vmatpush1.xpose.msra.mxu0 0.0
    %574 = vmatprep.subr.mxu0 0.0
    %575 = vmatpush1.xpose.msra.mxu0 0.0
    %576 = vmatprep.subr.mxu0 0.0
    %577 = vmatpush1.xpose.msra.mxu0 0.0
    %578 = vmatprep.subr.mxu0 0.0
    %579 = vmatpush1.xpose.msra.mxu0 0.0
    %580 = vmatprep.subr.mxu0 0.0
    %581 = vmatpush1.xpose.msra.mxu0 0.0
    %582 = vmatprep.subr.mxu0 0.0
    %583 = vmatpush1.xpose.msra.mxu0 0.0
    %584 = vmatprep.subr.mxu0 0.0
    %585 = vmatpush1.xpose.msra.mxu0 0.0
    %586 = vmatprep.subr.mxu0 0.0
    %587 = vmatpush1.xpose.msra.mxu0 0.0
    %588 = vmatprep.subr.mxu0 0.0
    %589 = vmatpush1.xpose.msra.mxu0 0.0
    %590 = vmatprep.subr.mxu0 0.0
    %591 = vmatpush1.xpose.msra.mxu0 0.0
    %592 = vmatprep.subr.mxu0 0.0
    %593 = vmatpush1.xpose.msra.mxu0 0.0
    %594 = vmatprep.subr.mxu0 0.0
    %595 = vmatpush1.xpose.msra.mxu0 0.0
    %596 = vmatprep.subr.mxu0 0.0
    %597 = vmatpush1.xpose.msra.mxu0 0.0
    %598 = vmatprep.subr.mxu0 0.0
    %599 = vmatpush1.xpose.msra.mxu0 0.0
    %600 = vmatprep.subr.mxu0 0.0
    %601 = vmatpush1.xpose.msra.mxu0 0.0
    %602 = vmatprep.subr.mxu0 0.0
    %603 = vmatpush1.xpose.msra.mxu0 0.0
    %604 = vmatprep.subr.mxu0 0.0
    %605 = vmatpush1.xpose.msra.mxu0 0.0
    %606 = vmatprep.subr.mxu0 0.0
    %607 = vmatpush1.xpose.msra.mxu0 0.0
    %608 = vmatprep.subr.mxu0 0.0
    %609 = vmatpush1.xpose.msra.mxu0 0.0
    %610 = vmatprep.subr.mxu0 0.0
    %611 = vmatpush1.xpose.msra.mxu0 0.0
    %612 = vmatprep.subr.mxu0 0.0
    %613 = vmatpush1.xpose.msra.mxu0 0.0
    %614 = vmatprep.subr.mxu0 0.0
    %615 = vmatpush1.xpose.msra.mxu0 0.0
    %616 = vmatprep.subr.mxu0 0.0
    %617 = vmatpush1.xpose.msra.mxu0 0.0
    %618 = vmatprep.subr.mxu0 0.0
    %619 = vmatpush1.xpose.msra.mxu0 0.0
    %620 = vmatprep.subr.mxu0 0.0
    %621 = vmatpush1.xpose.msra.mxu0 0.0
    %622 = vmatprep.subr.mxu0 0.0
    %623 = vmatpush1.xpose.msra.mxu0 0.0
    %624 = vmatprep.subr.mxu0 0.0
    %625 = vmatpush1.xpose.msra.mxu0 0.0
    %626 = vmatprep.subr.mxu0 0.0
    %627 = vmatpush1.xpose.msra.mxu0 0.0
    %628 = vmatprep.subr.mxu0 0.0
    %629 = vmatpush1.xpose.msra.mxu0 0.0
    %630 = vmatprep.subr.mxu0 0.0
    %631 = vmatpush1.xpose.msra.mxu0 0.0
    %632 = vmatprep.subr.mxu0 0.0
    %633 = vmatpush1.xpose.msra.mxu0 0.0
    %634 = vmatprep.mubr.f32.mxu0 0.0
    %635 = vmatmul.mubr.f32.gmra.mrb[0].mxu0 %v566
    %v636 = vpop.f32.mrb[0].mxu0
    %v637 = vadd.f32 0.0, %v636
    %v638 = vpop.f32.mrb[0].mxu0
    %639 = vdwg.mxu0
    %640 = vrot.lane.b32.xlu0 %v214, 120
    %v641 = vpop.permute.xlu0 %640
    %642 = vrot.lane.b32.xlu0 %v214, 88
    %v643 = vpop.permute.xlu0 %642
    %v644 = vsel %vm226, %v641, 0
    %v646 = vsel %vm226, %v643, 0
    %648 = vmatprep.subr.mxu0 0.0
    %649 = vmatpush1.xpose.msra.mxu0 %v646
    %650 = vmatprep.subr.mxu0 0.0
    %651 = vmatpush1.xpose.msra.mxu0 0.0
    %652 = vmatprep.subr.mxu0 0.0
    %653 = vmatpush1.xpose.msra.mxu0 0.0
    %654 = vmatprep.subr.mxu0 0.0
    %655 = vmatpush1.xpose.msra.mxu0 0.0
    %656 = vmatprep.subr.mxu0 0.0
    %657 = vmatpush1.xpose.msra.mxu0 0.0
    %658 = vmatprep.subr.mxu0 0.0
    %659 = vmatpush1.xpose.msra.mxu0 0.0
    %660 = vmatprep.subr.mxu0 0.0
    %661 = vmatpush1.xpose.msra.mxu0 0.0
    %662 = vmatprep.subr.mxu0 0.0
    %663 = vmatpush1.xpose.msra.mxu0 0.0
    %664 = vmatprep.subr.mxu0 0.0
    %665 = vmatpush1.xpose.msra.mxu0 0.0
    %666 = vmatprep.subr.mxu0 0.0
    %667 = vmatpush1.xpose.msra.mxu0 0.0
    %668 = vmatprep.subr.mxu0 0.0
    %669 = vmatpush1.xpose.msra.mxu0 0.0
    %670 = vmatprep.subr.mxu0 0.0
    %671 = vmatpush1.xpose.msra.mxu0 0.0
    %672 = vmatprep.subr.mxu0 0.0
    %673 = vmatpush1.xpose.msra.mxu0 0.0
    %674 = vmatprep.subr.mxu0 0.0
    %675 = vmatpush1.xpose.msra.mxu0 0.0
    %676 = vmatprep.subr.mxu0 0.0
    %677 = vmatpush1.xpose.msra.mxu0 0.0
    %678 = vmatprep.subr.mxu0 0.0
    %679 = vmatpush1.xpose.msra.mxu0 0.0
    %680 = vmatprep.subr.mxu0 0.0
    %681 = vmatpush1.xpose.msra.mxu0 0.0
    %682 = vmatprep.subr.mxu0 0.0
    %683 = vmatpush1.xpose.msra.mxu0 0.0
    %684 = vmatprep.subr.mxu0 0.0
    %685 = vmatpush1.xpose.msra.mxu0 0.0
    %686 = vmatprep.subr.mxu0 0.0
    %687 = vmatpush1.xpose.msra.mxu0 0.0
    %688 = vmatprep.subr.mxu0 0.0
    %689 = vmatpush1.xpose.msra.mxu0 0.0
    %690 = vmatprep.subr.mxu0 0.0
    %691 = vmatpush1.xpose.msra.mxu0 0.0
    %692 = vmatprep.subr.mxu0 0.0
    %693 = vmatpush1.xpose.msra.mxu0 0.0
    %694 = vmatprep.subr.mxu0 0.0
    %695 = vmatpush1.xpose.msra.mxu0 0.0
    %696 = vmatprep.subr.mxu0 0.0
    %697 = vmatpush1.xpose.msra.mxu0 0.0
    %698 = vmatprep.subr.mxu0 0.0
    %699 = vmatpush1.xpose.msra.mxu0 0.0
    %700 = vmatprep.subr.mxu0 0.0
    %701 = vmatpush1.xpose.msra.mxu0 0.0
    %702 = vmatprep.subr.mxu0 0.0
    %703 = vmatpush1.xpose.msra.mxu0 0.0
    %704 = vmatprep.subr.mxu0 0.0
    %705 = vmatpush1.xpose.msra.mxu0 0.0
    %706 = vmatprep.subr.mxu0 0.0
    %707 = vmatpush1.xpose.msra.mxu0 0.0
    %708 = vmatprep.subr.mxu0 0.0
    %709 = vmatpush1.xpose.msra.mxu0 0.0
    %710 = vmatprep.subr.mxu0 0.0
    %711 = vmatpush1.xpose.msra.mxu0 0.0
    %712 = vmatprep.mubr.f32.mxu0 0.0
    %713 = vmatmul.mubr.f32.gmra.mrb[0].mxu0 %v644
    %v714 = vpop.f32.mrb[0].mxu0
    %v715 = vadd.f32 0.0, %v714
    %v716 = vpop.f32.mrb[0].mxu0
    %717 = vdwg.mxu0
    %v718 = vmul.f32 %v637, 0.35355338
    %v719 = vmul.f32 %v715, 0.35355338
    %v720 = vadd.f32 %v718, %v222
    %v721 = vadd.f32 %v719, %v222
    %v722 = vsel %vm226, %v720, -inf
    %723 = vmax.xlane.f32.xlu0 %v722
    %v724 = vpop.xlane.xlu0 %723
    %v725 = vsel %vm226, %v721, -inf
    %726 = vmax.xlane.f32.xlu0 %v725
    %v727 = vpop.xlane.xlu0 %726
    %v728 = vsub.f32 %v720, %v724
    %v729 = vsub.f32 %v721, %v727
    %v730 = vmul.f32 %v728, 1.442695
    %v731 = vpow.pop %v730
    %v732 = vmul.f32 %v729, 1.442695
    %v733 = vpow.pop %v732
    %v734 = vsel %vm226, %v731, 0.0
    %735 = vadd.xlane.f32.xlu0 %v734
    %v736 = vpop.xlane.xlu0 %735
    %v737 = vsel %vm226, %v733, 0.0
    %738 = vadd.xlane.f32.xlu0 %v737
    %v739 = vpop.xlane.xlu0 %738
    %v740 = vrcp.pop %v736
    %v741 = vrcp.pop %v739
    %v742 = vmul.f32 %v736, %v740
    %v743 = vmul.f32 %v739, %v741
    %v744 = vsub.f32 2.0, %v742
    %v745 = vsub.f32 2.0, %v743
    %v746 = vmul.f32 %v740, %v744
    %v747 = vmul.f32 %v741, %v745
    %748 = vrot.lane.b32.xlu0 %v209, 56
    %v749 = vpop.permute.xlu0 %748
    %v752 = vsel %vm226, %v731, 0
    %754 = vmatprep.subr.mxu0 0.0
    %755 = vmatpush1.msra.mxu0 %v749
    %756 = vmatprep.subr.mxu0 0.0
    %757 = vmatpush1.msra.mxu0 0.0
    %758 = vmatprep.subr.mxu0 0.0
    %759 = vmatpush1.msra.mxu0 0.0
    %760 = vmatprep.subr.mxu0 0.0
    %761 = vmatpush1.msra.mxu0 0.0
    %762 = vmatprep.subr.mxu0 0.0
    %763 = vmatpush1.msra.mxu0 0.0
    %764 = vmatprep.subr.mxu0 0.0
    %765 = vmatpush1.msra.mxu0 0.0
    %766 = vmatprep.subr.mxu0 0.0
    %767 = vmatpush1.msra.mxu0 0.0
    %768 = vmatprep.subr.mxu0 0.0
    %769 = vmatpush1.msra.mxu0 0.0
    %770 = vmatprep.subr.mxu0 0.0
    %771 = vmatpush1.msra.mxu0 0.0
    %772 = vmatprep.subr.mxu0 0.0
    %773 = vmatpush1.msra.mxu0 0.0
    %774 = vmatprep.subr.mxu0 0.0
    %775 = vmatpush1.msra.mxu0 0.0
    %776 = vmatprep.subr.mxu0 0.0
    %777 = vmatpush1.msra.mxu0 0.0
    %778 = vmatprep.subr.mxu0 0.0
    %779 = vmatpush1.msra.mxu0 0.0
    %780 = vmatprep.subr.mxu0 0.0
    %781 = vmatpush1.msra.mxu0 0.0
    %782 = vmatprep.subr.mxu0 0.0
    %783 = vmatpush1.msra.mxu0 0.0
    %784 = vmatprep.subr.mxu0 0.0
    %785 = vmatpush1.msra.mxu0 0.0
    %786 = vmatprep.subr.mxu0 0.0
    %787 = vmatpush1.msra.mxu0 0.0
    %788 = vmatprep.subr.mxu0 0.0
    %789 = vmatpush1.msra.mxu0 0.0
    %790 = vmatprep.subr.mxu0 0.0
    %791 = vmatpush1.msra.mxu0 0.0
    %792 = vmatprep.subr.mxu0 0.0
    %793 = vmatpush1.msra.mxu0 0.0
    %794 = vmatprep.subr.mxu0 0.0
    %795 = vmatpush1.msra.mxu0 0.0
    %796 = vmatprep.subr.mxu0 0.0
    %797 = vmatpush1.msra.mxu0 0.0
    %798 = vmatprep.subr.mxu0 0.0
    %799 = vmatpush1.msra.mxu0 0.0
    %800 = vmatprep.subr.mxu0 0.0
    %801 = vmatpush1.msra.mxu0 0.0
    %802 = vmatprep.subr.mxu0 0.0
    %803 = vmatpush1.msra.mxu0 0.0
    %804 = vmatprep.subr.mxu0 0.0
    %805 = vmatpush1.msra.mxu0 0.0
    %806 = vmatprep.subr.mxu0 0.0
    %807 = vmatpush1.msra.mxu0 0.0
    %808 = vmatprep.subr.mxu0 0.0
    %809 = vmatpush1.msra.mxu0 0.0
    %810 = vmatprep.subr.mxu0 0.0
    %811 = vmatpush1.msra.mxu0 0.0
    %812 = vmatprep.subr.mxu0 0.0
    %813 = vmatpush1.msra.mxu0 0.0
    %814 = vmatprep.subr.mxu0 0.0
    %815 = vmatpush1.msra.mxu0 0.0
    %816 = vmatprep.subr.mxu0 0.0
    %817 = vmatpush1.msra.mxu0 0.0
    %818 = vmatprep.mubr.f32.mxu0 0.0
    %819 = vmatmul.mubr.f32.gmra.mrb[0].mxu0 %v752
    %v820 = vpop.f32.mrb[0].mxu0
    %v821 = vadd.f32 0.0, %v820
    %v822 = vpop.f32.mrb[0].mxu0
    %823 = vdwg.mxu0
    %824 = vrot.lane.b32.xlu0 %v214, 56
    %v825 = vpop.permute.xlu0 %824
    %v828 = vsel %vm226, %v733, 0
    %830 = vmatprep.subr.mxu0 0.0
    %831 = vmatpush1.msra.mxu0 %v825
    %832 = vmatprep.subr.mxu0 0.0
    %833 = vmatpush1.msra.mxu0 0.0
    %834 = vmatprep.subr.mxu0 0.0
    %835 = vmatpush1.msra.mxu0 0.0
    %836 = vmatprep.subr.mxu0 0.0
    %837 = vmatpush1.msra.mxu0 0.0
    %838 = vmatprep.subr.mxu0 0.0
    %839 = vmatpush1.msra.mxu0 0.0
    %840 = vmatprep.subr.mxu0 0.0
    %841 = vmatpush1.msra.mxu0 0.0
    %842 = vmatprep.subr.mxu0 0.0
    %843 = vmatpush1.msra.mxu0 0.0
    %844 = vmatprep.subr.mxu0 0.0
    %845 = vmatpush1.msra.mxu0 0.0
    %846 = vmatprep.subr.mxu0 0.0
    %847 = vmatpush1.msra.mxu0 0.0
    %848 = vmatprep.subr.mxu0 0.0
    %849 = vmatpush1.msra.mxu0 0.0
    %850 = vmatprep.subr.mxu0 0.0
    %851 = vmatpush1.msra.mxu0 0.0
    %852 = vmatprep.subr.mxu0 0.0
    %853 = vmatpush1.msra.mxu0 0.0
    %854 = vmatprep.subr.mxu0 0.0
    %855 = vmatpush1.msra.mxu0 0.0
    %856 = vmatprep.subr.mxu0 0.0
    %857 = vmatpush1.msra.mxu0 0.0
    %858 = vmatprep.subr.mxu0 0.0
    %859 = vmatpush1.msra.mxu0 0.0
    %860 = vmatprep.subr.mxu0 0.0
    %861 = vmatpush1.msra.mxu0 0.0
    %862 = vmatprep.subr.mxu0 0.0
    %863 = vmatpush1.msra.mxu0 0.0
    %864 = vmatprep.subr.mxu0 0.0
    %865 = vmatpush1.msra.mxu0 0.0
    %866 = vmatprep.subr.mxu0 0.0
    %867 = vmatpush1.msra.mxu0 0.0
    %868 = vmatprep.subr.mxu0 0.0
    %869 = vmatpush1.msra.mxu0 0.0
    %870 = vmatprep.subr.mxu0 0.0
    %871 = vmatpush1.msra.mxu0 0.0
    %872 = vmatprep.subr.mxu0 0.0
    %873 = vmatpush1.msra.mxu0 0.0
    %874 = vmatprep.subr.mxu0 0.0
    %875 = vmatpush1.msra.mxu0 0.0
    %876 = vmatprep.subr.mxu0 0.0
    %877 = vmatpush1.msra.mxu0 0.0
    %878 = vmatprep.subr.mxu0 0.0
    %879 = vmatpush1.msra.mxu0 0.0
    %880 = vmatprep.subr.mxu0 0.0
    %881 = vmatpush1.msra.mxu0 0.0
    %882 = vmatprep.subr.mxu0 0.0
    %883 = vmatpush1.msra.mxu0 0.0
    %884 = vmatprep.subr.mxu0 0.0
    %885 = vmatpush1.msra.mxu0 0.0
    %886 = vmatprep.subr.mxu0 0.0
    %887 = vmatpush1.msra.mxu0 0.0
    %888 = vmatprep.subr.mxu0 0.0
    %889 = vmatpush1.msra.mxu0 0.0
    %890 = vmatprep.subr.mxu0 0.0
    %891 = vmatpush1.msra.mxu0 0.0
    %892 = vmatprep.subr.mxu0 0.0
    %893 = vmatpush1.msra.mxu0 0.0
    %894 = vmatprep.mubr.f32.mxu0 0.0
    %895 = vmatmul.mubr.f32.gmra.mrb[0].mxu0 %v828
    %v896 = vpop.f32.mrb[0].mxu0
    %v897 = vadd.f32 0.0, %v896
    %v898 = vpop.f32.mrb[0].mxu0
    %899 = vdwg.mxu0
    %v900 = vmul.f32 %v821, %v746
    %v901 = vmul.f32 %v897, %v747
    %902 = vrot.lane.b32.xlu0 %v209, 112
    %v903 = vpop.permute.xlu0 %902
    %904 = vrot.lane.b32.xlu0 %v209, 80
    %v905 = vpop.permute.xlu0 %904
    %v906 = vsel %vm226, %v903, 0
    %v908 = vsel %vm226, %v905, 0
    %910 = vmatprep.subr.mxu0 0.0
    %911 = vmatpush1.xpose.msra.mxu0 %v908
    %912 = vmatprep.subr.mxu0 0.0
    %913 = vmatpush1.xpose.msra.mxu0 0.0
    %914 = vmatprep.subr.mxu0 0.0
    %915 = vmatpush1.xpose.msra.mxu0 0.0
    %916 = vmatprep.subr.mxu0 0.0
    %917 = vmatpush1.xpose.msra.mxu0 0.0
    %918 = vmatprep.subr.mxu0 0.0
    %919 = vmatpush1.xpose.msra.mxu0 0.0
    %920 = vmatprep.subr.mxu0 0.0
    %921 = vmatpush1.xpose.msra.mxu0 0.0
    %922 = vmatprep.subr.mxu0 0.0
    %923 = vmatpush1.xpose.msra.mxu0 0.0
    %924 = vmatprep.subr.mxu0 0.0
    %925 = vmatpush1.xpose.msra.mxu0 0.0
    %926 = vmatprep.subr.mxu0 0.0
    %927 = vmatpush1.xpose.msra.mxu0 0.0
    %928 = vmatprep.subr.mxu0 0.0
    %929 = vmatpush1.xpose.msra.mxu0 0.0
    %930 = vmatprep.subr.mxu0 0.0
    %931 = vmatpush1.xpose.msra.mxu0 0.0
    %932 = vmatprep.subr.mxu0 0.0
    %933 = vmatpush1.xpose.msra.mxu0 0.0
    %934 = vmatprep.subr.mxu0 0.0
    %935 = vmatpush1.xpose.msra.mxu0 0.0
    %936 = vmatprep.subr.mxu0 0.0
    %937 = vmatpush1.xpose.msra.mxu0 0.0
    %938 = vmatprep.subr.mxu0 0.0
    %939 = vmatpush1.xpose.msra.mxu0 0.0
    %940 = vmatprep.subr.mxu0 0.0
    %941 = vmatpush1.xpose.msra.mxu0 0.0
    %942 = vmatprep.subr.mxu0 0.0
    %943 = vmatpush1.xpose.msra.mxu0 0.0
    %944 = vmatprep.subr.mxu0 0.0
    %945 = vmatpush1.xpose.msra.mxu0 0.0
    %946 = vmatprep.subr.mxu0 0.0
    %947 = vmatpush1.xpose.msra.mxu0 0.0
    %948 = vmatprep.subr.mxu0 0.0
    %949 = vmatpush1.xpose.msra.mxu0 0.0
    %950 = vmatprep.subr.mxu0 0.0
    %951 = vmatpush1.xpose.msra.mxu0 0.0
    %952 = vmatprep.subr.mxu0 0.0
    %953 = vmatpush1.xpose.msra.mxu0 0.0
    %954 = vmatprep.subr.mxu0 0.0
    %955 = vmatpush1.xpose.msra.mxu0 0.0
    %956 = vmatprep.subr.mxu0 0.0
    %957 = vmatpush1.xpose.msra.mxu0 0.0
    %958 = vmatprep.subr.mxu0 0.0
    %959 = vmatpush1.xpose.msra.mxu0 0.0
    %960 = vmatprep.subr.mxu0 0.0
    %961 = vmatpush1.xpose.msra.mxu0 0.0
    %962 = vmatprep.subr.mxu0 0.0
    %963 = vmatpush1.xpose.msra.mxu0 0.0
    %964 = vmatprep.subr.mxu0 0.0
    %965 = vmatpush1.xpose.msra.mxu0 0.0
    %966 = vmatprep.subr.mxu0 0.0
    %967 = vmatpush1.xpose.msra.mxu0 0.0
    %968 = vmatprep.subr.mxu0 0.0
    %969 = vmatpush1.xpose.msra.mxu0 0.0
    %970 = vmatprep.subr.mxu0 0.0
    %971 = vmatpush1.xpose.msra.mxu0 0.0
    %972 = vmatprep.subr.mxu0 0.0
    %973 = vmatpush1.xpose.msra.mxu0 0.0
    %974 = vmatprep.mubr.f32.mxu0 0.0
    %975 = vmatmul.mubr.f32.gmra.mrb[0].mxu0 %v906
    %v976 = vpop.f32.mrb[0].mxu0
    %v977 = vadd.f32 0.0, %v976
    %v978 = vpop.f32.mrb[0].mxu0
    %979 = vdwg.mxu0
    %980 = vrot.lane.b32.xlu0 %v214, 112
    %v981 = vpop.permute.xlu0 %980
    %982 = vrot.lane.b32.xlu0 %v214, 80
    %v983 = vpop.permute.xlu0 %982
    %v984 = vsel %vm226, %v981, 0
    %v986 = vsel %vm226, %v983, 0
    %988 = vmatprep.subr.mxu0 0.0
    %989 = vmatpush1.xpose.msra.mxu0 %v986
    %990 = vmatprep.subr.mxu0 0.0
    %991 = vmatpush1.xpose.msra.mxu0 0.0
    %992 = vmatprep.subr.mxu0 0.0
    %993 = vmatpush1.xpose.msra.mxu0 0.0
    %994 = vmatprep.subr.mxu0 0.0
    %995 = vmatpush1.xpose.msra.mxu0 0.0
    %996 = vmatprep.subr.mxu0 0.0
    %997 = vmatpush1.xpose.msra.mxu0 0.0
    %998 = vmatprep.subr.mxu0 0.0
    %999 = vmatpush1.xpose.msra.mxu0 0.0
    %1000 = vmatprep.subr.mxu0 0.0
    %1001 = vmatpush1.xpose.msra.mxu0 0.0
    %1002 = vmatprep.subr.mxu0 0.0
    %1003 = vmatpush1.xpose.msra.mxu0 0.0
    %1004 = vmatprep.subr.mxu0 0.0
    %1005 = vmatpush1.xpose.msra.mxu0 0.0
    %1006 = vmatprep.subr.mxu0 0.0
    %1007 = vmatpush1.xpose.msra.mxu0 0.0
    %1008 = vmatprep.subr.mxu0 0.0
    %1009 = vmatpush1.xpose.msra.mxu0 0.0
    %1010 = vmatprep.subr.mxu0 0.0
    %1011 = vmatpush1.xpose.msra.mxu0 0.0
    %1012 = vmatprep.subr.mxu0 0.0
    %1013 = vmatpush1.xpose.msra.mxu0 0.0
    %1014 = vmatprep.subr.mxu0 0.0
    %1015 = vmatpush1.xpose.msra.mxu0 0.0
    %1016 = vmatprep.subr.mxu0 0.0
    %1017 = vmatpush1.xpose.msra.mxu0 0.0
    %1018 = vmatprep.subr.mxu0 0.0
    %1019 = vmatpush1.xpose.msra.mxu0 0.0
    %1020 = vmatprep.subr.mxu0 0.0
    %1021 = vmatpush1.xpose.msra.mxu0 0.0
    %1022 = vmatprep.subr.mxu0 0.0
    %1023 = vmatpush1.xpose.msra.mxu0 0.0
    %1024 = vmatprep.subr.mxu0 0.0
    %1025 = vmatpush1.xpose.msra.mxu0 0.0
    %1026 = vmatprep.subr.mxu0 0.0
    %1027 = vmatpush1.xpose.msra.mxu0 0.0
    %1028 = vmatprep.subr.mxu0 0.0
    %1029 = vmatpush1.xpose.msra.mxu0 0.0
    %1030 = vmatprep.subr.mxu0 0.0
    %1031 = vmatpush1.xpose.msra.mxu0 0.0
    %1032 = vmatprep.subr.mxu0 0.0
    %1033 = vmatpush1.xpose.msra.mxu0 0.0
    %1034 = vmatprep.subr.mxu0 0.0
    %1035 = vmatpush1.xpose.msra.mxu0 0.0
    %1036 = vmatprep.subr.mxu0 0.0
    %1037 = vmatpush1.xpose.msra.mxu0 0.0
    %1038 = vmatprep.subr.mxu0 0.0
    %1039 = vmatpush1.xpose.msra.mxu0 0.0
    %1040 = vmatprep.subr.mxu0 0.0
    %1041 = vmatpush1.xpose.msra.mxu0 0.0
    %1042 = vmatprep.subr.mxu0 0.0
    %1043 = vmatpush1.xpose.msra.mxu0 0.0
    %1044 = vmatprep.subr.mxu0 0.0
    %1045 = vmatpush1.xpose.msra.mxu0 0.0
    %1046 = vmatprep.subr.mxu0 0.0
    %1047 = vmatpush1.xpose.msra.mxu0 0.0
    %1048 = vmatprep.subr.mxu0 0.0
    %1049 = vmatpush1.xpose.msra.mxu0 0.0
    %1050 = vmatprep.subr.mxu0 0.0
    %1051 = vmatpush1.xpose.msra.mxu0 0.0
    %1052 = vmatprep.mubr.f32.mxu0 0.0
    %1053 = vmatmul.mubr.f32.gmra.mrb[0].mxu0 %v984
    %v1054 = vpop.f32.mrb[0].mxu0
    %v1055 = vadd.f32 0.0, %v1054
    %v1056 = vpop.f32.mrb[0].mxu0
    %1057 = vdwg.mxu0
    %v1058 = vmul.f32 %v977, 0.35355338
    %v1059 = vmul.f32 %v1055, 0.35355338
    %v1060 = vadd.f32 %v1058, %v222
    %v1061 = vadd.f32 %v1059, %v222
    %v1062 = vsel %vm226, %v1060, -inf
    %1063 = vmax.xlane.f32.xlu0 %v1062
    %v1064 = vpop.xlane.xlu0 %1063
    %v1065 = vsel %vm226, %v1061, -inf
    %1066 = vmax.xlane.f32.xlu0 %v1065
    %v1067 = vpop.xlane.xlu0 %1066
    %v1068 = vsub.f32 %v1060, %v1064
    %v1069 = vsub.f32 %v1061, %v1067
    %v1070 = vmul.f32 %v1068, 1.442695
    %v1071 = vpow.pop %v1070
    %v1072 = vmul.f32 %v1069, 1.442695
    %v1073 = vpow.pop %v1072
    %v1074 = vsel %vm226, %v1071, 0.0
    %1075 = vadd.xlane.f32.xlu0 %v1074
    %v1076 = vpop.xlane.xlu0 %1075
    %v1077 = vsel %vm226, %v1073, 0.0
    %1078 = vadd.xlane.f32.xlu0 %v1077
    %v1079 = vpop.xlane.xlu0 %1078
    %v1080 = vrcp.pop %v1076
    %v1081 = vrcp.pop %v1079
    %v1082 = vmul.f32 %v1076, %v1080
    %v1083 = vmul.f32 %v1079, %v1081
    %v1084 = vsub.f32 2.0, %v1082
    %v1085 = vsub.f32 2.0, %v1083
    %v1086 = vmul.f32 %v1080, %v1084
    %v1087 = vmul.f32 %v1081, %v1085
    %1088 = vrot.lane.b32.xlu0 %v209, 48
    %v1089 = vpop.permute.xlu0 %1088
    %v1092 = vsel %vm226, %v1071, 0
    %1094 = vmatprep.subr.mxu0 0.0
    %1095 = vmatpush1.msra.mxu0 %v1089
    %1096 = vmatprep.subr.mxu0 0.0
    %1097 = vmatpush1.msra.mxu0 0.0
    %1098 = vmatprep.subr.mxu0 0.0
    %1099 = vmatpush1.msra.mxu0 0.0
    %1100 = vmatprep.subr.mxu0 0.0
    %1101 = vmatpush1.msra.mxu0 0.0
    %1102 = vmatprep.subr.mxu0 0.0
    %1103 = vmatpush1.msra.mxu0 0.0
    %1104 = vmatprep.subr.mxu0 0.0
    %1105 = vmatpush1.msra.mxu0 0.0
    %1106 = vmatprep.subr.mxu0 0.0
    %1107 = vmatpush1.msra.mxu0 0.0
    %1108 = vmatprep.subr.mxu0 0.0
    %1109 = vmatpush1.msra.mxu0 0.0
    %1110 = vmatprep.subr.mxu0 0.0
    %1111 = vmatpush1.msra.mxu0 0.0
    %1112 = vmatprep.subr.mxu0 0.0
    %1113 = vmatpush1.msra.mxu0 0.0
    %1114 = vmatprep.subr.mxu0 0.0
    %1115 = vmatpush1.msra.mxu0 0.0
    %1116 = vmatprep.subr.mxu0 0.0
    %1117 = vmatpush1.msra.mxu0 0.0
    %1118 = vmatprep.subr.mxu0 0.0
    %1119 = vmatpush1.msra.mxu0 0.0
    %1120 = vmatprep.subr.mxu0 0.0
    %1121 = vmatpush1.msra.mxu0 0.0
    %1122 = vmatprep.subr.mxu0 0.0
    %1123 = vmatpush1.msra.mxu0 0.0
    %1124 = vmatprep.subr.mxu0 0.0
    %1125 = vmatpush1.msra.mxu0 0.0
    %1126 = vmatprep.subr.mxu0 0.0
    %1127 = vmatpush1.msra.mxu0 0.0
    %1128 = vmatprep.subr.mxu0 0.0
    %1129 = vmatpush1.msra.mxu0 0.0
    %1130 = vmatprep.subr.mxu0 0.0
    %1131 = vmatpush1.msra.mxu0 0.0
    %1132 = vmatprep.subr.mxu0 0.0
    %1133 = vmatpush1.msra.mxu0 0.0
    %1134 = vmatprep.subr.mxu0 0.0
    %1135 = vmatpush1.msra.mxu0 0.0
    %1136 = vmatprep.subr.mxu0 0.0
    %1137 = vmatpush1.msra.mxu0 0.0
    %1138 = vmatprep.subr.mxu0 0.0
    %1139 = vmatpush1.msra.mxu0 0.0
    %1140 = vmatprep.subr.mxu0 0.0
    %1141 = vmatpush1.msra.mxu0 0.0
    %1142 = vmatprep.subr.mxu0 0.0
    %1143 = vmatpush1.msra.mxu0 0.0
    %1144 = vmatprep.subr.mxu0 0.0
    %1145 = vmatpush1.msra.mxu0 0.0
    %1146 = vmatprep.subr.mxu0 0.0
    %1147 = vmatpush1.msra.mxu0 0.0
    %1148 = vmatprep.subr.mxu0 0.0
    %1149 = vmatpush1.msra.mxu0 0.0
    %1150 = vmatprep.subr.mxu0 0.0
    %1151 = vmatpush1.msra.mxu0 0.0
    %1152 = vmatprep.subr.mxu0 0.0
    %1153 = vmatpush1.msra.mxu0 0.0
    %1154 = vmatprep.subr.mxu0 0.0
    %1155 = vmatpush1.msra.mxu0 0.0
    %1156 = vmatprep.subr.mxu0 0.0
    %1157 = vmatpush1.msra.mxu0 0.0
    %1158 = vmatprep.mubr.f32.mxu0 0.0
    %1159 = vmatmul.mubr.f32.gmra.mrb[0].mxu0 %v1092
    %v1160 = vpop.f32.mrb[0].mxu0
    %v1161 = vadd.f32 0.0, %v1160
    %v1162 = vpop.f32.mrb[0].mxu0
    %1163 = vdwg.mxu0
    %1164 = vrot.lane.b32.xlu0 %v214, 48
    %v1165 = vpop.permute.xlu0 %1164
    %v1168 = vsel %vm226, %v1073, 0
    %1170 = vmatprep.subr.mxu0 0.0
    %1171 = vmatpush1.msra.mxu0 %v1165
    %1172 = vmatprep.subr.mxu0 0.0
    %1173 = vmatpush1.msra.mxu0 0.0
    %1174 = vmatprep.subr.mxu0 0.0
    %1175 = vmatpush1.msra.mxu0 0.0
    %1176 = vmatprep.subr.mxu0 0.0
    %1177 = vmatpush1.msra.mxu0 0.0
    %1178 = vmatprep.subr.mxu0 0.0
    %1179 = vmatpush1.msra.mxu0 0.0
    %1180 = vmatprep.subr.mxu0 0.0
    %1181 = vmatpush1.msra.mxu0 0.0
    %1182 = vmatprep.subr.mxu0 0.0
    %1183 = vmatpush1.msra.mxu0 0.0
    %1184 = vmatprep.subr.mxu0 0.0
    %1185 = vmatpush1.msra.mxu0 0.0
    %1186 = vmatprep.subr.mxu0 0.0
    %1187 = vmatpush1.msra.mxu0 0.0
    %1188 = vmatprep.subr.mxu0 0.0
    %1189 = vmatpush1.msra.mxu0 0.0
    %1190 = vmatprep.subr.mxu0 0.0
    %1191 = vmatpush1.msra.mxu0 0.0
    %1192 = vmatprep.subr.mxu0 0.0
    %1193 = vmatpush1.msra.mxu0 0.0
    %1194 = vmatprep.subr.mxu0 0.0
    %1195 = vmatpush1.msra.mxu0 0.0
    %1196 = vmatprep.subr.mxu0 0.0
    %1197 = vmatpush1.msra.mxu0 0.0
    %1198 = vmatprep.subr.mxu0 0.0
    %1199 = vmatpush1.msra.mxu0 0.0
    %1200 = vmatprep.subr.mxu0 0.0
    %1201 = vmatpush1.msra.mxu0 0.0
    %1202 = vmatprep.subr.mxu0 0.0
    %1203 = vmatpush1.msra.mxu0 0.0
    %1204 = vmatprep.subr.mxu0 0.0
    %1205 = vmatpush1.msra.mxu0 0.0
    %1206 = vmatprep.subr.mxu0 0.0
    %1207 = vmatpush1.msra.mxu0 0.0
    %1208 = vmatprep.subr.mxu0 0.0
    %1209 = vmatpush1.msra.mxu0 0.0
    %1210 = vmatprep.subr.mxu0 0.0
    %1211 = vmatpush1.msra.mxu0 0.0
    %1212 = vmatprep.subr.mxu0 0.0
    %1213 = vmatpush1.msra.mxu0 0.0
    %1214 = vmatprep.subr.mxu0 0.0
    %1215 = vmatpush1.msra.mxu0 0.0
    %1216 = vmatprep.subr.mxu0 0.0
    %1217 = vmatpush1.msra.mxu0 0.0
    %1218 = vmatprep.subr.mxu0 0.0
    %1219 = vmatpush1.msra.mxu0 0.0
    %1220 = vmatprep.subr.mxu0 0.0
    %1221 = vmatpush1.msra.mxu0 0.0
    %1222 = vmatprep.subr.mxu0 0.0
    %1223 = vmatpush1.msra.mxu0 0.0
    %1224 = vmatprep.subr.mxu0 0.0
    %1225 = vmatpush1.msra.mxu0 0.0
    %1226 = vmatprep.subr.mxu0 0.0
    %1227 = vmatpush1.msra.mxu0 0.0
    %1228 = vmatprep.subr.mxu0 0.0
    %1229 = vmatpush1.msra.mxu0 0.0
    %1230 = vmatprep.subr.mxu0 0.0
    %1231 = vmatpush1.msra.mxu0 0.0
    %1232 = vmatprep.subr.mxu0 0.0
    %1233 = vmatpush1.msra.mxu0 0.0
    %1234 = vmatprep.mubr.f32.mxu0 0.0
    %1235 = vmatmul.mubr.f32.gmra.mrb[0].mxu0 %v1168
    %v1236 = vpop.f32.mrb[0].mxu0
    %v1237 = vadd.f32 0.0, %v1236
    %v1238 = vpop.f32.mrb[0].mxu0
    %1239 = vdwg.mxu0
    %v1240 = vmul.f32 %v1161, %v1086
    %v1241 = vmul.f32 %v1237, %v1087
    %1242 = vrot.lane.b32.xlu0 %v209, 104
    %v1243 = vpop.permute.xlu0 %1242
    %1244 = vrot.lane.b32.xlu0 %v209, 72
    %v1245 = vpop.permute.xlu0 %1244
    %v1246 = vsel %vm226, %v1243, 0
    %v1248 = vsel %vm226, %v1245, 0
    %1250 = vmatprep.subr.mxu0 0.0
    %1251 = vmatpush1.xpose.msra.mxu0 %v1248
    %1252 = vmatprep.subr.mxu0 0.0
    %1253 = vmatpush1.xpose.msra.mxu0 0.0
    %1254 = vmatprep.subr.mxu0 0.0
    %1255 = vmatpush1.xpose.msra.mxu0 0.0
    %1256 = vmatprep.subr.mxu0 0.0
    %1257 = vmatpush1.xpose.msra.mxu0 0.0
    %1258 = vmatprep.subr.mxu0 0.0
    %1259 = vmatpush1.xpose.msra.mxu0 0.0
    %1260 = vmatprep.subr.mxu0 0.0
    %1261 = vmatpush1.xpose.msra.mxu0 0.0
    %1262 = vmatprep.subr.mxu0 0.0
    %1263 = vmatpush1.xpose.msra.mxu0 0.0
    %1264 = vmatprep.subr.mxu0 0.0
    %1265 = vmatpush1.xpose.msra.mxu0 0.0
    %1266 = vmatprep.subr.mxu0 0.0
    %1267 = vmatpush1.xpose.msra.mxu0 0.0
    %1268 = vmatprep.subr.mxu0 0.0
    %1269 = vmatpush1.xpose.msra.mxu0 0.0
    %1270 = vmatprep.subr.mxu0 0.0
    %1271 = vmatpush1.xpose.msra.mxu0 0.0
    %1272 = vmatprep.subr.mxu0 0.0
    %1273 = vmatpush1.xpose.msra.mxu0 0.0
    %1274 = vmatprep.subr.mxu0 0.0
    %1275 = vmatpush1.xpose.msra.mxu0 0.0
    %1276 = vmatprep.subr.mxu0 0.0
    %1277 = vmatpush1.xpose.msra.mxu0 0.0
    %1278 = vmatprep.subr.mxu0 0.0
    %1279 = vmatpush1.xpose.msra.mxu0 0.0
    %1280 = vmatprep.subr.mxu0 0.0
    %1281 = vmatpush1.xpose.msra.mxu0 0.0
    %1282 = vmatprep.subr.mxu0 0.0
    %1283 = vmatpush1.xpose.msra.mxu0 0.0
    %1284 = vmatprep.subr.mxu0 0.0
    %1285 = vmatpush1.xpose.msra.mxu0 0.0
    %1286 = vmatprep.subr.mxu0 0.0
    %1287 = vmatpush1.xpose.msra.mxu0 0.0
    %1288 = vmatprep.subr.mxu0 0.0
    %1289 = vmatpush1.xpose.msra.mxu0 0.0
    %1290 = vmatprep.subr.mxu0 0.0
    %1291 = vmatpush1.xpose.msra.mxu0 0.0
    %1292 = vmatprep.subr.mxu0 0.0
    %1293 = vmatpush1.xpose.msra.mxu0 0.0
    %1294 = vmatprep.subr.mxu0 0.0
    %1295 = vmatpush1.xpose.msra.mxu0 0.0
    %1296 = vmatprep.subr.mxu0 0.0
    %1297 = vmatpush1.xpose.msra.mxu0 0.0
    %1298 = vmatprep.subr.mxu0 0.0
    %1299 = vmatpush1.xpose.msra.mxu0 0.0
    %1300 = vmatprep.subr.mxu0 0.0
    %1301 = vmatpush1.xpose.msra.mxu0 0.0
    %1302 = vmatprep.subr.mxu0 0.0
    %1303 = vmatpush1.xpose.msra.mxu0 0.0
    %1304 = vmatprep.subr.mxu0 0.0
    %1305 = vmatpush1.xpose.msra.mxu0 0.0
    %1306 = vmatprep.subr.mxu0 0.0
    %1307 = vmatpush1.xpose.msra.mxu0 0.0
    %1308 = vmatprep.subr.mxu0 0.0
    %1309 = vmatpush1.xpose.msra.mxu0 0.0
    %1310 = vmatprep.subr.mxu0 0.0
    %1311 = vmatpush1.xpose.msra.mxu0 0.0
    %1312 = vmatprep.subr.mxu0 0.0
    %1313 = vmatpush1.xpose.msra.mxu0 0.0
    %1314 = vmatprep.mubr.f32.mxu0 0.0
    %1315 = vmatmul.mubr.f32.gmra.mrb[0].mxu0 %v1246
    %v1316 = vpop.f32.mrb[0].mxu0
    %v1317 = vadd.f32 0.0, %v1316
    %v1318 = vpop.f32.mrb[0].mxu0
    %1319 = vdwg.mxu0
    %1320 = vrot.lane.b32.xlu0 %v214, 104
    %v1321 = vpop.permute.xlu0 %1320
    %1322 = vrot.lane.b32.xlu0 %v214, 72
    %v1323 = vpop.permute.xlu0 %1322
    %v1324 = vsel %vm226, %v1321, 0
    %v1326 = vsel %vm226, %v1323, 0
    %1328 = vmatprep.subr.mxu0 0.0
    %1329 = vmatpush1.xpose.msra.mxu0 %v1326
    %1330 = vmatprep.subr.mxu0 0.0
    %1331 = vmatpush1.xpose.msra.mxu0 0.0
    %1332 = vmatprep.subr.mxu0 0.0
    %1333 = vmatpush1.xpose.msra.mxu0 0.0
    %1334 = vmatprep.subr.mxu0 0.0
    %1335 = vmatpush1.xpose.msra.mxu0 0.0
    %1336 = vmatprep.subr.mxu0 0.0
    %1337 = vmatpush1.xpose.msra.mxu0 0.0
    %1338 = vmatprep.subr.mxu0 0.0
    %1339 = vmatpush1.xpose.msra.mxu0 0.0
    %1340 = vmatprep.subr.mxu0 0.0
    %1341 = vmatpush1.xpose.msra.mxu0 0.0
    %1342 = vmatprep.subr.mxu0 0.0
    %1343 = vmatpush1.xpose.msra.mxu0 0.0
    %1344 = vmatprep.subr.mxu0 0.0
    %1345 = vmatpush1.xpose.msra.mxu0 0.0
    %1346 = vmatprep.subr.mxu0 0.0
    %1347 = vmatpush1.xpose.msra.mxu0 0.0
    %1348 = vmatprep.subr.mxu0 0.0
    %1349 = vmatpush1.xpose.msra.mxu0 0.0
    %1350 = vmatprep.subr.mxu0 0.0
    %1351 = vmatpush1.xpose.msra.mxu0 0.0
    %1352 = vmatprep.subr.mxu0 0.0
    %1353 = vmatpush1.xpose.msra.mxu0 0.0
    %1354 = vmatprep.subr.mxu0 0.0
    %1355 = vmatpush1.xpose.msra.mxu0 0.0
    %1356 = vmatprep.subr.mxu0 0.0
    %1357 = vmatpush1.xpose.msra.mxu0 0.0
    %1358 = vmatprep.subr.mxu0 0.0
    %1359 = vmatpush1.xpose.msra.mxu0 0.0
    %1360 = vmatprep.subr.mxu0 0.0
    %1361 = vmatpush1.xpose.msra.mxu0 0.0
    %1362 = vmatprep.subr.mxu0 0.0
    %1363 = vmatpush1.xpose.msra.mxu0 0.0
    %1364 = vmatprep.subr.mxu0 0.0
    %1365 = vmatpush1.xpose.msra.mxu0 0.0
    %1366 = vmatprep.subr.mxu0 0.0
    %1367 = vmatpush1.xpose.msra.mxu0 0.0
    %1368 = vmatprep.subr.mxu0 0.0
    %1369 = vmatpush1.xpose.msra.mxu0 0.0
    %1370 = vmatprep.subr.mxu0 0.0
    %1371 = vmatpush1.xpose.msra.mxu0 0.0
    %1372 = vmatprep.subr.mxu0 0.0
    %1373 = vmatpush1.xpose.msra.mxu0 0.0
    %1374 = vmatprep.subr.mxu0 0.0
    %1375 = vmatpush1.xpose.msra.mxu0 0.0
    %1376 = vmatprep.subr.mxu0 0.0
    %1377 = vmatpush1.xpose.msra.mxu0 0.0
    %1378 = vmatprep.subr.mxu0 0.0
    %1379 = vmatpush1.xpose.msra.mxu0 0.0
    %1380 = vmatprep.subr.mxu0 0.0
    %1381 = vmatpush1.xpose.msra.mxu0 0.0
    %1382 = vmatprep.subr.mxu0 0.0
    %1383 = vmatpush1.xpose.msra.mxu0 0.0
    %1384 = vmatprep.subr.mxu0 0.0
    %1385 = vmatpush1.xpose.msra.mxu0 0.0
    %1386 = vmatprep.subr.mxu0 0.0
    %1387 = vmatpush1.xpose.msra.mxu0 0.0
    %1388 = vmatprep.subr.mxu0 0.0
    %1389 = vmatpush1.xpose.msra.mxu0 0.0
    %1390 = vmatprep.subr.mxu0 0.0
    %1391 = vmatpush1.xpose.msra.mxu0 0.0
    %1392 = vmatprep.mubr.f32.mxu0 0.0
    %1393 = vmatmul.mubr.f32.gmra.mrb[0].mxu0 %v1324
    %v1394 = vpop.f32.mrb[0].mxu0
    %v1395 = vadd.f32 0.0, %v1394
    %v1396 = vpop.f32.mrb[0].mxu0
    %1397 = vdwg.mxu0
    %v1398 = vmul.f32 %v1317, 0.35355338
    %v1399 = vmul.f32 %v1395, 0.35355338
    %v1400 = vadd.f32 %v1398, %v222
    %v1401 = vadd.f32 %v1399, %v222
    %v1402 = vsel %vm226, %v1400, -inf
    %1403 = vmax.xlane.f32.xlu0 %v1402
    %v1404 = vpop.xlane.xlu0 %1403
    %v1405 = vsel %vm226, %v1401, -inf
    %1406 = vmax.xlane.f32.xlu0 %v1405
    %v1407 = vpop.xlane.xlu0 %1406
    %v1408 = vsub.f32 %v1400, %v1404
    %v1409 = vsub.f32 %v1401, %v1407
    %v1410 = vmul.f32 %v1408, 1.442695
    %v1411 = vpow.pop %v1410
    %v1412 = vmul.f32 %v1409, 1.442695
    %v1413 = vpow.pop %v1412
    %v1414 = vsel %vm226, %v1411, 0.0
    %1415 = vadd.xlane.f32.xlu0 %v1414
    %v1416 = vpop.xlane.xlu0 %1415
    %v1417 = vsel %vm226, %v1413, 0.0
    %1418 = vadd.xlane.f32.xlu0 %v1417
    %v1419 = vpop.xlane.xlu0 %1418
    %v1420 = vrcp.pop %v1416
    %v1421 = vrcp.pop %v1419
    %v1422 = vmul.f32 %v1416, %v1420
    %v1423 = vmul.f32 %v1419, %v1421
    %v1424 = vsub.f32 2.0, %v1422
    %v1425 = vsub.f32 2.0, %v1423
    %v1426 = vmul.f32 %v1420, %v1424
    %v1427 = vmul.f32 %v1421, %v1425
    %1428 = vrot.lane.b32.xlu0 %v209, 40
    %v1429 = vpop.permute.xlu0 %1428
    %v1432 = vsel %vm226, %v1411, 0
    %1434 = vmatprep.subr.mxu0 0.0
    %1435 = vmatpush1.msra.mxu0 %v1429
    %1436 = vmatprep.subr.mxu0 0.0
    %1437 = vmatpush1.msra.mxu0 0.0
    %1438 = vmatprep.subr.mxu0 0.0
    %1439 = vmatpush1.msra.mxu0 0.0
    %1440 = vmatprep.subr.mxu0 0.0
    %1441 = vmatpush1.msra.mxu0 0.0
    %1442 = vmatprep.subr.mxu0 0.0
    %1443 = vmatpush1.msra.mxu0 0.0
    %1444 = vmatprep.subr.mxu0 0.0
    %1445 = vmatpush1.msra.mxu0 0.0
    %1446 = vmatprep.subr.mxu0 0.0
    %1447 = vmatpush1.msra.mxu0 0.0
    %1448 = vmatprep.subr.mxu0 0.0
    %1449 = vmatpush1.msra.mxu0 0.0
    %1450 = vmatprep.subr.mxu0 0.0
    %1451 = vmatpush1.msra.mxu0 0.0
    %1452 = vmatprep.subr.mxu0 0.0
    %1453 = vmatpush1.msra.mxu0 0.0
    %1454 = vmatprep.subr.mxu0 0.0
    %1455 = vmatpush1.msra.mxu0 0.0
    %1456 = vmatprep.subr.mxu0 0.0
    %1457 = vmatpush1.msra.mxu0 0.0
    %1458 = vmatprep.subr.mxu0 0.0
    %1459 = vmatpush1.msra.mxu0 0.0
    %1460 = vmatprep.subr.mxu0 0.0
    %1461 = vmatpush1.msra.mxu0 0.0
    %1462 = vmatprep.subr.mxu0 0.0
    %1463 = vmatpush1.msra.mxu0 0.0
    %1464 = vmatprep.subr.mxu0 0.0
    %1465 = vmatpush1.msra.mxu0 0.0
    %1466 = vmatprep.subr.mxu0 0.0
    %1467 = vmatpush1.msra.mxu0 0.0
    %1468 = vmatprep.subr.mxu0 0.0
    %1469 = vmatpush1.msra.mxu0 0.0
    %1470 = vmatprep.subr.mxu0 0.0
    %1471 = vmatpush1.msra.mxu0 0.0
    %1472 = vmatprep.subr.mxu0 0.0
    %1473 = vmatpush1.msra.mxu0 0.0
    %1474 = vmatprep.subr.mxu0 0.0
    %1475 = vmatpush1.msra.mxu0 0.0
    %1476 = vmatprep.subr.mxu0 0.0
    %1477 = vmatpush1.msra.mxu0 0.0
    %1478 = vmatprep.subr.mxu0 0.0
    %1479 = vmatpush1.msra.mxu0 0.0
    %1480 = vmatprep.subr.mxu0 0.0
    %1481 = vmatpush1.msra.mxu0 0.0
    %1482 = vmatprep.subr.mxu0 0.0
    %1483 = vmatpush1.msra.mxu0 0.0
    %1484 = vmatprep.subr.mxu0 0.0
    %1485 = vmatpush1.msra.mxu0 0.0
    %1486 = vmatprep.subr.mxu0 0.0
    %1487 = vmatpush1.msra.mxu0 0.0
    %1488 = vmatprep.subr.mxu0 0.0
    %1489 = vmatpush1.msra.mxu0 0.0
    %1490 = vmatprep.subr.mxu0 0.0
    %1491 = vmatpush1.msra.mxu0 0.0
    %1492 = vmatprep.subr.mxu0 0.0
    %1493 = vmatpush1.msra.mxu0 0.0
    %1494 = vmatprep.subr.mxu0 0.0
    %1495 = vmatpush1.msra.mxu0 0.0
    %1496 = vmatprep.subr.mxu0 0.0
    %1497 = vmatpush1.msra.mxu0 0.0
    %1498 = vmatprep.mubr.f32.mxu0 0.0
    %1499 = vmatmul.mubr.f32.gmra.mrb[0].mxu0 %v1432
    %v1500 = vpop.f32.mrb[0].mxu0
    %v1501 = vadd.f32 0.0, %v1500
    %v1502 = vpop.f32.mrb[0].mxu0
    %1503 = vdwg.mxu0
    %1504 = vrot.lane.b32.xlu0 %v214, 40
    %v1505 = vpop.permute.xlu0 %1504
    %v1508 = vsel %vm226, %v1413, 0
    %1510 = vmatprep.subr.mxu0 0.0
    %1511 = vmatpush1.msra.mxu0 %v1505
    %1512 = vmatprep.subr.mxu0 0.0
    %1513 = vmatpush1.msra.mxu0 0.0
    %1514 = vmatprep.subr.mxu0 0.0
    %1515 = vmatpush1.msra.mxu0 0.0
    %1516 = vmatprep.subr.mxu0 0.0
    %1517 = vmatpush1.msra.mxu0 0.0
    %1518 = vmatprep.subr.mxu0 0.0
    %1519 = vmatpush1.msra.mxu0 0.0
    %1520 = vmatprep.subr.mxu0 0.0
    %1521 = vmatpush1.msra.mxu0 0.0
    %1522 = vmatprep.subr.mxu0 0.0
    %1523 = vmatpush1.msra.mxu0 0.0
    %1524 = vmatprep.subr.mxu0 0.0
    %1525 = vmatpush1.msra.mxu0 0.0
    %1526 = vmatprep.subr.mxu0 0.0
    %1527 = vmatpush1.msra.mxu0 0.0
    %1528 = vmatprep.subr.mxu0 0.0
    %1529 = vmatpush1.msra.mxu0 0.0
    %1530 = vmatprep.subr.mxu0 0.0
    %1531 = vmatpush1.msra.mxu0 0.0
    %1532 = vmatprep.subr.mxu0 0.0
    %1533 = vmatpush1.msra.mxu0 0.0
    %1534 = vmatprep.subr.mxu0 0.0
    %1535 = vmatpush1.msra.mxu0 0.0
    %1536 = vmatprep.subr.mxu0 0.0
    %1537 = vmatpush1.msra.mxu0 0.0
    %1538 = vmatprep.subr.mxu0 0.0
    %1539 = vmatpush1.msra.mxu0 0.0
    %1540 = vmatprep.subr.mxu0 0.0
    %1541 = vmatpush1.msra.mxu0 0.0
    %1542 = vmatprep.subr.mxu0 0.0
    %1543 = vmatpush1.msra.mxu0 0.0
    %1544 = vmatprep.subr.mxu0 0.0
    %1545 = vmatpush1.msra.mxu0 0.0
    %1546 = vmatprep.subr.mxu0 0.0
    %1547 = vmatpush1.msra.mxu0 0.0
    %1548 = vmatprep.subr.mxu0 0.0
    %1549 = vmatpush1.msra.mxu0 0.0
    %1550 = vmatprep.subr.mxu0 0.0
    %1551 = vmatpush1.msra.mxu0 0.0
    %1552 = vmatprep.subr.mxu0 0.0
    %1553 = vmatpush1.msra.mxu0 0.0
    %1554 = vmatprep.subr.mxu0 0.0
    %1555 = vmatpush1.msra.mxu0 0.0
    %1556 = vmatprep.subr.mxu0 0.0
    %1557 = vmatpush1.msra.mxu0 0.0
    %1558 = vmatprep.subr.mxu0 0.0
    %1559 = vmatpush1.msra.mxu0 0.0
    %1560 = vmatprep.subr.mxu0 0.0
    %1561 = vmatpush1.msra.mxu0 0.0
    %1562 = vmatprep.subr.mxu0 0.0
    %1563 = vmatpush1.msra.mxu0 0.0
    %1564 = vmatprep.subr.mxu0 0.0
    %1565 = vmatpush1.msra.mxu0 0.0
    %1566 = vmatprep.subr.mxu0 0.0
    %1567 = vmatpush1.msra.mxu0 0.0
    %1568 = vmatprep.subr.mxu0 0.0
    %1569 = vmatpush1.msra.mxu0 0.0
    %1570 = vmatprep.subr.mxu0 0.0
    %1571 = vmatpush1.msra.mxu0 0.0
    %1572 = vmatprep.subr.mxu0 0.0
    %1573 = vmatpush1.msra.mxu0 0.0
    %1574 = vmatprep.mubr.f32.mxu0 0.0
    %1575 = vmatmul.mubr.f32.gmra.mrb[0].mxu0 %v1508
    %v1576 = vpop.f32.mrb[0].mxu0
    %v1577 = vadd.f32 0.0, %v1576
    %v1578 = vpop.f32.mrb[0].mxu0
    %1579 = vdwg.mxu0
    %v1580 = vmul.f32 %v1501, %v1426
    %v1581 = vmul.f32 %v1577, %v1427
    %1584 = vrot.lane.b32.xlu0 %v900, 8
    %v1585 = vpop.permute.xlu0 %1584
    %1586 = vrot.lane.b32.xlu0 %v901, 8
    %v1587 = vpop.permute.xlu0 %1586
    %1592 = vrot.lane.b32.xlu0 %v1240, 16
    %v1593 = vpop.permute.xlu0 %1592
    %1594 = vrot.lane.b32.xlu0 %v1241, 16
    %v1595 = vpop.permute.xlu0 %1594
    %1600 = vrot.lane.b32.xlu0 %v1580, 24
    %v1601 = vpop.permute.xlu0 %1600
    %1602 = vrot.lane.b32.xlu0 %v1581, 24
    %v1603 = vpop.permute.xlu0 %1602
    %v1606 = vsel %vm226, %v560, %v1585
    %v1607 = vsel %vm226, %v561, %v1587
    %vm1608 = vcmask 130048
    %v1609 = vsel %vm1608, %v1606, %v1593
    %v1610 = vsel %vm1608, %v1607, %v1595
    %vm1611 = vcmask 195584
    %v1612 = vsel %vm1611, %v1609, %v1601
    %v1613 = vsel %vm1611, %v1610, %v1603
    %v1614 = vlaneseq
    %v1615 = vshrl.u32 %v1614, 7
    %v1616 = vsub.s32 0, %v1615
    %v1617 = vrot.slane %v61, %v1616
    %v1619 = vsel %vm92, %v1612, 0
    %v1622 = vsel %vm92, %v1613, 0
    %1624 = vmatprep.subr.mxu0 0.0
    %1625 = vmatpush1.msra.mxu0 %v68
    %1626 = vmatprep.subr.mxu0 0.0
    %1627 = vmatpush1.msra.mxu0 %v69
    %1628 = vmatprep.subr.mxu0 0.0
    %1629 = vmatpush1.msra.mxu0 %v70
    %1630 = vmatprep.subr.mxu0 0.0
    %1631 = vmatpush1.msra.mxu0 %v71
    %1632 = vmatprep.subr.mxu0 0.0
    %1633 = vmatpush1.msra.mxu0 0.0
    %1634 = vmatprep.subr.mxu0 0.0
    %1635 = vmatpush1.msra.mxu0 0.0
    %1636 = vmatprep.subr.mxu0 0.0
    %1637 = vmatpush1.msra.mxu0 0.0
    %1638 = vmatprep.subr.mxu0 0.0
    %1639 = vmatpush1.msra.mxu0 0.0
    %1640 = vmatprep.subr.mxu0 0.0
    %1641 = vmatpush1.msra.mxu0 0.0
    %1642 = vmatprep.subr.mxu0 0.0
    %1643 = vmatpush1.msra.mxu0 0.0
    %1644 = vmatprep.subr.mxu0 0.0
    %1645 = vmatpush1.msra.mxu0 0.0
    %1646 = vmatprep.subr.mxu0 0.0
    %1647 = vmatpush1.msra.mxu0 0.0
    %1648 = vmatprep.subr.mxu0 0.0
    %1649 = vmatpush1.msra.mxu0 0.0
    %1650 = vmatprep.subr.mxu0 0.0
    %1651 = vmatpush1.msra.mxu0 0.0
    %1652 = vmatprep.subr.mxu0 0.0
    %1653 = vmatpush1.msra.mxu0 0.0
    %1654 = vmatprep.subr.mxu0 0.0
    %1655 = vmatpush1.msra.mxu0 0.0
    %1656 = vmatprep.subr.mxu0 0.0
    %1657 = vmatpush1.msra.mxu0 0.0
    %1658 = vmatprep.subr.mxu0 0.0
    %1659 = vmatpush1.msra.mxu0 0.0
    %1660 = vmatprep.subr.mxu0 0.0
    %1661 = vmatpush1.msra.mxu0 0.0
    %1662 = vmatprep.subr.mxu0 0.0
    %1663 = vmatpush1.msra.mxu0 0.0
    %1664 = vmatprep.subr.mxu0 0.0
    %1665 = vmatpush1.msra.mxu0 0.0
    %1666 = vmatprep.subr.mxu0 0.0
    %1667 = vmatpush1.msra.mxu0 0.0
    %1668 = vmatprep.subr.mxu0 0.0
    %1669 = vmatpush1.msra.mxu0 0.0
    %1670 = vmatprep.subr.mxu0 0.0
    %1671 = vmatpush1.msra.mxu0 0.0
    %1672 = vmatprep.subr.mxu0 0.0
    %1673 = vmatpush1.msra.mxu0 0.0
    %1674 = vmatprep.subr.mxu0 0.0
    %1675 = vmatpush1.msra.mxu0 0.0
    %1676 = vmatprep.subr.mxu0 0.0
    %1677 = vmatpush1.msra.mxu0 0.0
    %1678 = vmatprep.subr.mxu0 0.0
    %1679 = vmatpush1.msra.mxu0 0.0
    %1680 = vmatprep.subr.mxu0 0.0
    %1681 = vmatpush1.msra.mxu0 0.0
    %1682 = vmatprep.subr.mxu0 0.0
    %1683 = vmatpush1.msra.mxu0 0.0
    %1684 = vmatprep.subr.mxu0 0.0
    %1685 = vmatpush1.msra.mxu0 0.0
    %1686 = vmatprep.subr.mxu0 0.0
    %1687 = vmatpush1.msra.mxu0 0.0
    %1688 = vmatprep.mubr.f32.mxu0 0.0
    %1689 = vmatmul.mubr.f32.gmra.mrb[0].mxu0 %v1619
    %v1690 = vpop.f32.mrb[0].mxu0
    %v1691 = vadd.f32 %v1617, %v1690
    %v1692 = vpop.f32.mrb[0].mxu0
    %1693 = vmatprep.mubr.f32.mxu0 0.0
    %1694 = vmatmul.mubr.f32.gmra.mrb[0].mxu0 %v1622
    %v1695 = vpop.f32.mrb[0].mxu0
    %v1696 = vadd.f32 %v1617, %v1695
    %v1697 = vpop.f32.mrb[0].mxu0
    %1698 = vdwg.mxu0
    %v1699 = vadd.f32 %v1691, %v54
    %v1700 = vadd.f32 %v1696, %v55
    %v1701 = vsel %vm92, %v1699, 0.0
    %1702 = vadd.xlane.f32.xlu0 %v1701
    %v1703 = vpop.xlane.xlu0 %1702
    %v1704 = vsel %vm92, %v1700, 0.0
    %1705 = vadd.xlane.f32.xlu0 %v1704
    %v1706 = vpop.xlane.xlu0 %1705
    %v1707 = vmul.f32 %v1703, %v99
    %v1708 = vmul.f32 %v1706, %v99
    %v1709 = vsub.f32 %v1699, %v1707
    %v1710 = vsub.f32 %v1700, %v1708
    %v1711 = vmul.f32 %v1709, %v1709
    %v1712 = vmul.f32 %v1710, %v1710
    %v1713 = vsel %vm92, %v1711, 0.0
    %1714 = vadd.xlane.f32.xlu0 %v1713
    %v1715 = vpop.xlane.xlu0 %1714
    %v1716 = vsel %vm92, %v1712, 0.0
    %1717 = vadd.xlane.f32.xlu0 %v1716
    %v1718 = vpop.xlane.xlu0 %1717
    %v1719 = vmul.f32 %v1715, %v99
    %v1720 = vmul.f32 %v1718, %v99
    %v1721 = vadd.f32 %v1719, 1e-05
    %v1722 = vadd.f32 %v1720, 1e-05
    %v1723 = vrsqrt.pop %v1721
    %v1724 = vrsqrt.pop %v1722
    %v1725 = vmul.f32 %v1709, %v1723
    %v1726 = vmul.f32 %v1710, %v1724
    %v1727 = vlaneseq
    %v1728 = vshrl.u32 %v1727, 7
    %v1729 = vsub.s32 0, %v1728
    %v1730 = vrot.slane %v58, %v1729
    %v1731 = vmul.f32 %v1725, %v1730
    %v1732 = vmul.f32 %v1726, %v1730
    %v1733 = vlaneseq
    %v1734 = vshrl.u32 %v1733, 7
    %v1735 = vsub.s32 0, %v1734
    %v1736 = vrot.slane %v59, %v1735
    %v1737 = vadd.f32 %v1731, %v1736
    %v1738 = vadd.f32 %v1732, %v1736
    %v1739 = vlaneseq
    %v1740 = vshrl.u32 %v1739, 7
    %v1741 = vsub.s32 0, %v1740
    %v1742 = vrot.slane %v62, %v1741
    %v1744 = vsel %vm92, %v1737, 0
    %v1747 = vsel %vm92, %v1738, 0
    %1749 = vmatprep.subr.mxu0 0.0
    %1750 = vmatpush1.msra.mxu0 %v72
    %1751 = vmatprep.subr.mxu0 0.0
    %1752 = vmatpush1.msra.mxu0 %v73
    %1753 = vmatprep.subr.mxu0 0.0
    %1754 = vmatpush1.msra.mxu0 %v74
    %1755 = vmatprep.subr.mxu0 0.0
    %1756 = vmatpush1.msra.mxu0 %v75
    %1757 = vmatprep.subr.mxu0 0.0
    %1758 = vmatpush1.msra.mxu0 0.0
    %1759 = vmatprep.subr.mxu0 0.0
    %1760 = vmatpush1.msra.mxu0 0.0
    %1761 = vmatprep.subr.mxu0 0.0
    %1762 = vmatpush1.msra.mxu0 0.0
    %1763 = vmatprep.subr.mxu0 0.0
    %1764 = vmatpush1.msra.mxu0 0.0
    %1765 = vmatprep.subr.mxu0 0.0
    %1766 = vmatpush1.msra.mxu0 0.0
    %1767 = vmatprep.subr.mxu0 0.0
    %1768 = vmatpush1.msra.mxu0 0.0
    %1769 = vmatprep.subr.mxu0 0.0
    %1770 = vmatpush1.msra.mxu0 0.0
    %1771 = vmatprep.subr.mxu0 0.0
    %1772 = vmatpush1.msra.mxu0 0.0
    %1773 = vmatprep.subr.mxu0 0.0
    %1774 = vmatpush1.msra.mxu0 0.0
    %1775 = vmatprep.subr.mxu0 0.0
    %1776 = vmatpush1.msra.mxu0 0.0
    %1777 = vmatprep.subr.mxu0 0.0
    %1778 = vmatpush1.msra.mxu0 0.0
    %1779 = vmatprep.subr.mxu0 0.0
    %1780 = vmatpush1.msra.mxu0 0.0
    %1781 = vmatprep.subr.mxu0 0.0
    %1782 = vmatpush1.msra.mxu0 0.0
    %1783 = vmatprep.subr.mxu0 0.0
    %1784 = vmatpush1.msra.mxu0 0.0
    %1785 = vmatprep.subr.mxu0 0.0
    %1786 = vmatpush1.msra.mxu0 0.0
    %1787 = vmatprep.subr.mxu0 0.0
    %1788 = vmatpush1.msra.mxu0 0.0
    %1789 = vmatprep.subr.mxu0 0.0
    %1790 = vmatpush1.msra.mxu0 0.0
    %1791 = vmatprep.subr.mxu0 0.0
    %1792 = vmatpush1.msra.mxu0 0.0
    %1793 = vmatprep.subr.mxu0 0.0
    %1794 = vmatpush1.msra.mxu0 0.0
    %1795 = vmatprep.subr.mxu0 0.0
    %1796 = vmatpush1.msra.mxu0 0.0
    %1797 = vmatprep.subr.mxu0 0.0
    %1798 = vmatpush1.msra.mxu0 0.0
    %1799 = vmatprep.subr.mxu0 0.0
    %1800 = vmatpush1.msra.mxu0 0.0
    %1801 = vmatprep.subr.mxu0 0.0
    %1802 = vmatpush1.msra.mxu0 0.0
    %1803 = vmatprep.subr.mxu0 0.0
    %1804 = vmatpush1.msra.mxu0 0.0
    %1805 = vmatprep.subr.mxu0 0.0
    %1806 = vmatpush1.msra.mxu0 0.0
    %1807 = vmatprep.subr.mxu0 0.0
    %1808 = vmatpush1.msra.mxu0 0.0
    %1809 = vmatprep.subr.mxu0 0.0
    %1810 = vmatpush1.msra.mxu0 0.0
    %1811 = vmatprep.subr.mxu0 0.0
    %1812 = vmatpush1.msra.mxu0 0.0
    %1813 = vmatprep.mubr.f32.mxu0 0.0
    %1814 = vmatmul.mubr.f32.gmra.mrb[0].mxu0 %v1744
    %v1815 = vpop.f32.mrb[0].mxu0
    %v1816 = vadd.f32 %v1742, %v1815
    %v1817 = vpop.f32.mrb[0].mxu0
    %1818 = vmatprep.mubr.f32.mxu0 0.0
    %1819 = vmatmul.mubr.f32.gmra.mrb[0].mxu0 %v1747
    %v1820 = vpop.f32.mrb[0].mxu0
    %v1821 = vadd.f32 %v1742, %v1820
    %v1822 = vpop.f32.mrb[0].mxu0
    %1823 = vdwg.mxu0
    %v1824 = vmax.f32 %v1816, 0.0
    %v1825 = vmax.f32 %v1821, 0.0
    %v1826 = vlaneseq
    %v1827 = vshrl.u32 %v1826, 7
    %v1828 = vsub.s32 0, %v1827
    %v1829 = vrot.slane %v63, %v1828
    %1830 = vmatprep.subr.mxu0 0.0
    %1831 = vmatpush1.msra.mxu0 %v76
    %1832 = vmatprep.subr.mxu0 0.0
    %1833 = vmatpush1.msra.mxu0 %v77
    %1834 = vmatprep.subr.mxu0 0.0
    %1835 = vmatpush1.msra.mxu0 %v78
    %1836 = vmatprep.subr.mxu0 0.0
    %1837 = vmatpush1.msra.mxu0 %v79
    %1838 = vmatprep.subr.mxu0 0.0
    %1839 = vmatpush1.msra.mxu0 %v80
    %1840 = vmatprep.subr.mxu0 0.0
    %1841 = vmatpush1.msra.mxu0 %v81
    %1842 = vmatprep.subr.mxu0 0.0
    %1843 = vmatpush1.msra.mxu0 %v82
    %1844 = vmatprep.subr.mxu0 0.0
    %1845 = vmatpush1.msra.mxu0 %v83
    %1846 = vmatprep.subr.mxu0 0.0
    %1847 = vmatpush1.msra.mxu0 %v84
    %1848 = vmatprep.subr.mxu0 0.0
    %1849 = vmatpush1.msra.mxu0 %v85
    %1850 = vmatprep.subr.mxu0 0.0
    %1851 = vmatpush1.msra.mxu0 %v86
    %1852 = vmatprep.subr.mxu0 0.0
    %1853 = vmatpush1.msra.mxu0 %v87
    %1854 = vmatprep.subr.mxu0 0.0
    %1855 = vmatpush1.msra.mxu0 %v88
    %1856 = vmatprep.subr.mxu0 0.0
    %1857 = vmatpush1.msra.mxu0 %v89
    %1858 = vmatprep.subr.mxu0 0.0
    %1859 = vmatpush1.msra.mxu0 %v90
    %1860 = vmatprep.subr.mxu0 0.0
    %1861 = vmatpush1.msra.mxu0 %v91
    %1862 = vmatprep.subr.mxu0 0.0
    %1863 = vmatpush1.msra.mxu0 0.0
    %1864 = vmatprep.subr.mxu0 0.0
    %1865 = vmatpush1.msra.mxu0 0.0
    %1866 = vmatprep.subr.mxu0 0.0
    %1867 = vmatpush1.msra.mxu0 0.0
    %1868 = vmatprep.subr.mxu0 0.0
    %1869 = vmatpush1.msra.mxu0 0.0
    %1870 = vmatprep.subr.mxu0 0.0
    %1871 = vmatpush1.msra.mxu0 0.0
    %1872 = vmatprep.subr.mxu0 0.0
    %1873 = vmatpush1.msra.mxu0 0.0
    %1874 = vmatprep.subr.mxu0 0.0
    %1875 = vmatpush1.msra.mxu0 0.0
    %1876 = vmatprep.subr.mxu0 0.0
    %1877 = vmatpush1.msra.mxu0 0.0
    %1878 = vmatprep.subr.mxu0 0.0
    %1879 = vmatpush1.msra.mxu0 0.0
    %1880 = vmatprep.subr.mxu0 0.0
    %1881 = vmatpush1.msra.mxu0 0.0
    %1882 = vmatprep.subr.mxu0 0.0
    %1883 = vmatpush1.msra.mxu0 0.0
    %1884 = vmatprep.subr.mxu0 0.0
    %1885 = vmatpush1.msra.mxu0 0.0
    %1886 = vmatprep.subr.mxu0 0.0
    %1887 = vmatpush1.msra.mxu0 0.0
    %1888 = vmatprep.subr.mxu0 0.0
    %1889 = vmatpush1.msra.mxu0 0.0
    %1890 = vmatprep.subr.mxu0 0.0
    %1891 = vmatpush1.msra.mxu0 0.0
    %1892 = vmatprep.subr.mxu0 0.0
    %1893 = vmatpush1.msra.mxu0 0.0
    %1894 = vmatprep.mubr.f32.mxu0 0.0
    %1895 = vmatmul.mubr.f32.gmra.mrb[0].mxu0 %v1824
    %v1896 = vpop.f32.mrb[0].mxu0
    %v1897 = vadd.f32 %v1829, %v1896
    %v1898 = vpop.f32.mrb[0].mxu0
    %1899 = vmatprep.mubr.f32.mxu0 0.0
    %1900 = vmatmul.mubr.f32.gmra.mrb[0].mxu0 %v1825
    %v1901 = vpop.f32.mrb[0].mxu0
    %v1902 = vadd.f32 %v1829, %v1901
    %v1903 = vpop.f32.mrb[0].mxu0
    %1904 = vdwg.mxu0
    %v1905 = vadd.f32 %v1897, %v1699
    %v1906 = vadd.f32 %v1902, %v1700
    %1907 = vst.msk [vmem:[#allocation8] sm:$0xff] %vm92, %v1905
    %1908 = vst.msk [vmem:[#allocation8 + $0x8] sm:$0xff] %vm92, %v1906
    // Predicated region
    $region26: #{tpu_custom_call.1} parent=1 // pred_check
      _
    $region27: #{tpu_custom_call.1} parent=1 // pred_check_branch
      %1910 = sbr.rel (0) target = $region29
    $region28: #{tpu_custom_call.1} parent=1 // pred_region
      %s1912 = ssub.s32 256, 256
      %1913 = vsyncadd [#allocation4], %s1912
      %s1914 = sshll.u32 [#allocation8], 4
      %s1915 = int_to_ptr.vmem [resolvable:$true] %s1914
      %1920 = dma.vmem_to_hbm [thread:$0]  %s1915, 256, %s3, [#allocation4], 128, 128, 8
    $region29: #{tpu_custom_call.1} parent=1 // pred_fallthru
      _
    // Predicated region
    $region30: #{tpu_custom_call.1} parent=1 // pred_check
      _
    $region31: #{tpu_custom_call.1} parent=1 // pred_check_branch
      %1922 = sbr.rel (0) target = $region33
    $region32: #{tpu_custom_call.1} parent=1 // pred_region
      %1923 = dma.done [#allocation4], 256
    $region33: #{tpu_custom_call.1} parent=1 // pred_fallthru
      _
    %1924 = vsyncpa [#allocation3], 1
    %1925 = vsyncpa [#allocation6], 1
    %1926 = vsyncpa [#allocation4], 1

</llo_original>
